<compile_context>
chip_gen: v6e
topology: v6e:2x2x1
jax: 0.10.0
libtpu: 0.0.40
codegen_flags: <defaults>
</compile_context>

<pallas_src>
import functools

import jax
import jax.numpy as jnp
from jax.experimental import pallas as pl
from jax.experimental.pallas import tpu as pltpu


def _round_up(x, m):
    return ((x + m - 1) // m) * m


def _vmem_capacity_bytes():
    """Best-effort per-core VMEM capacity; conservative (v7x) fallback."""
    try:
        cap = int(pltpu.get_tpu_info().vmem_capacity_bytes)
        if cap > 0:
            return cap
    except Exception:
        pass
    return 64 << 20


def _pick_tn(n_pad, k_pad, budget_bytes, w_itemsize):
    """Largest divisor of n_pad (multiple of 128) whose double-buffered full-K weight
    slab fits the budget; prefer an even block count (v7x 2-TC split) or 1 block."""
    cands = [d for d in range(128, n_pad + 1, 128) if n_pad % d == 0]
    cands.sort(reverse=True)
    fitting = [t for t in cands if 2 * k_pad * t * w_itemsize <= budget_bytes]
    if not fitting:
        fitting = [cands[-1]]
    for t in fitting:
        nb = n_pad // t
        if nb == 1 or nb % 2 == 0:
            return t
    return fitting[0]


# ---------------------------------------------------------------------------
# Kernels: one grid step = one (tm, tn) output tile, full-K dot + fused epilogue.
# ---------------------------------------------------------------------------

def _linear_kernel(x_ref, w_ref, b_ref, o_ref, *, relu):
    y = jnp.dot(x_ref[...], w_ref[...], preferred_element_type=jnp.float32)
    y = y + b_ref[...]
    if relu:
        y = jnp.maximum(y, 0.0)
    o_ref[...] = y.astype(o_ref.dtype)


def _linear_residual_kernel(x_ref, w_ref, b_ref, r_ref, o_ref):
    y = jnp.dot(x_ref[...], w_ref[...], preferred_element_type=jnp.float32)
    y = y + b_ref[...] + r_ref[...].astype(jnp.float32)
    o_ref[...] = y.astype(o_ref.dtype)


# ---------------------------------------------------------------------------
# Wrapper: expects ALREADY-PADDED inputs (see prepare_params / resnet_forward).
# ---------------------------------------------------------------------------

def _padded_linear(x, w, b, *, residual=None, relu=False,
                   out_dtype=jnp.float32, max_tm=256):
    """x: (M_pad, K_pad) bf16, w: (K_pad, N_pad) bf16, b: (1, N_pad) f32."""
    M_pad, K_pad = x.shape
    Kw, N_pad = w.shape
    assert K_pad == Kw and b.shape == (1, N_pad)
    assert M_pad % 8 == 0 and K_pad % 128 == 0 and N_pad % 128 == 0
    if residual is not None:
        assert residual.shape == (M_pad, N_pad)
        assert not relu

    # Batch axis: single small block (batch ~8); MXU occupancy is irrelevant here.
    if M_pad <= max_tm:
        tm = M_pad
    else:
        tm = max(t for t in range(8, max_tm + 1, 8) if M_pad % t == 0)

    cap = _vmem_capacity_bytes()
    w_isz = jnp.dtype(w.dtype).itemsize
    tn = _pick_tn(N_pad, K_pad, cap // 2, w_isz)

    grid = (M_pad // tm, N_pad // tn)

    in_specs = [
        pl.BlockSpec((tm, K_pad), lambda i, j: (i, 0)),   # full-K resident activations
        pl.BlockSpec((K_pad, tn), lambda i, j: (0, j)),   # streamed weight column slab
        pl.BlockSpec((1, tn), lambda i, j: (0, j)),       # bias
    ]
    args = [x, w, b]
    if residual is None:
        kernel = functools.partial(_linear_kernel, relu=relu)
    else:
        kernel = _linear_residual_kernel
        in_specs.append(pl.BlockSpec((tm, tn), lambda i, j: (i, j)))
        args.append(residual)

    # VMEM plan: double-buffered weight slab dominates (<= cap/2 by construction).
    need = (2 * K_pad * tn * w_isz
            + 2 * tm * K_pad * jnp.dtype(x.dtype).itemsize
            + 2 * tm * tn * jnp.dtype(out_dtype).itemsize
            + 2 * tn * 4
            + (2 * tm * tn * jnp.dtype(residual.dtype).itemsize
               if residual is not None else 0))
    vmem_limit = int(max(min(need + (16 << 20), cap - (8 << 20)), need + (2 << 20)))

    return pl.pallas_call(
        kernel,
        out_shape=jax.ShapeDtypeStruct((M_pad, N_pad), out_dtype),
        grid_spec=pltpu.PrefetchScalarGridSpec(
            num_scalar_prefetch=0,
            grid=grid,
            in_specs=in_specs,
            out_specs=pl.BlockSpec((tm, tn), lambda i, j: (i, j)),
        ),
        compiler_params=pltpu.CompilerParams(
            dimension_semantics=("parallel", "parallel"),
            vmem_limit_bytes=vmem_limit,
        ),
    )(*args)


# ---------------------------------------------------------------------------
# Parameter prep (one-time, outside the per-call path) and the jitted forward.
# ---------------------------------------------------------------------------

def init_params(key, d):
    """Deterministic Linear init (uniform, like PyTorch's default scheme)."""
    k1, k2, k3, k4 = jax.random.split(key, 4)
    bound = 1.0 / jnp.sqrt(d)
    w1 = jax.random.uniform(k1, (d, d), jnp.float32, -bound, bound)  # (out, in)
    b1 = jax.random.uniform(k2, (d,), jnp.float32, -bound, bound)
    w2 = jax.random.uniform(k3, (d, d), jnp.float32, -bound, bound)
    b2 = jax.random.uniform(k4, (d,), jnp.float32, -bound, bound)
    # pre-transpose to (in, out) and store bf16 (kernel accumulates in f32)
    return (w1.T.astype(jnp.bfloat16), b1, w2.T.astype(jnp.bfloat16), b2)


def prepare_params(params, align=256):
    """One-time prep: zero-pad weights/biases to a fixed 256-aligned size (10240 for
    D=10000), independent of tile choice.  Padding is exactly zero, so padded K rows
    contribute nothing to the reduction and padded N columns of y1 stay zero."""
    w1_t, b1, w2_t, b2 = params
    K1, N1 = w1_t.shape
    K2, N2 = w2_t.shape
    Kp1, Np1 = _round_up(K1, align), _round_up(N1, align)
    Kp2, Np2 = _round_up(K2, align), _round_up(N2, align)
    assert Np1 == Kp2, "layer-1 output width must feed layer-2 input width"
    w1p = jnp.pad(w1_t, ((0, Kp1 - K1), (0, Np1 - N1)))
    w2p = jnp.pad(w2_t, ((0, Kp2 - K2), (0, Np2 - N2)))
    b1p = jnp.pad(b1, (0, Np1 - N1)).reshape(1, Np1).astype(jnp.float32)
    b2p = jnp.pad(b2, (0, Np2 - N2)).reshape(1, Np2).astype(jnp.float32)
    return (w1p, b1p, w2p, b2p)


@jax.jit
def resnet_forward(x, padded_params):
    """ResNet.forward: block(x) + x, block = Linear -> ReLU -> Linear.
    `padded_params` must come from prepare_params (pre-padded, bf16 weights)."""
    w1p, b1p, w2p, b2p = padded_params
    M, D = x.shape
    Kp1, _ = w1p.shape
    _, Np2 = w2p.shape
    M_pad = _round_up(M, 8)

    # Activation padding is ~KBs vs the ~200 MB/layer weight stream: fine per call.
    x_bf16 = jnp.pad(x.astype(jnp.bfloat16), ((0, M_pad - M), (0, Kp1 - D)))
    r_f32 = jnp.pad(x, ((0, M_pad - M), (0, Np2 - D)))

    y1 = _padded_linear(x_bf16, w1p, b1p, relu=True, out_dtype=jnp.bfloat16)
    out = _padded_linear(y1, w2p, b2p, residual=r_f32, out_dtype=jnp.float32)
    return out[:M, :D]


if __name__ == "__main__":
    # Small stand-in for (batch, 10000); D deliberately NOT a multiple of 128/256
    # to exercise the padding path needed at the real hidden size 10000.
    B, D = 4, 300
    key = jax.random.PRNGKey(0)
    kx, kp = jax.random.split(key)
    x = jax.random.normal(kx, (B, D), jnp.float32)
    raw_params = init_params(kp, D)
    params = prepare_params(raw_params)   # one-time prep, hoisted out of the forward

    out = jax.block_until_ready(resnet_forward(x, params))

    # pure-JAX reference (matching the kernel's bf16 operand rounding, f32 accum,
    # bf16 y1 hand-off between the two layers)
    w1_t, b1, w2_t, b2 = raw_params
    w1f = w1_t.astype(jnp.float32)
    w2f = w2_t.astype(jnp.float32)
    xb = x.astype(jnp.bfloat16).astype(jnp.float32)
    y1 = jnp.maximum(xb @ w1f + b1, 0.0)
    ref = y1.astype(jnp.bfloat16).astype(jnp.float32) @ w2f + b2 + x

    assert out.shape == (B, D)
    err = float(jnp.max(jnp.abs(out - ref)))
    assert jnp.allclose(out, ref, atol=3e-2, rtol=3e-2), err

    print("KERNEL_OK")
</pallas_src>

<mosaic_0001>
module attributes {stable_mosaic.version = 11 : i64} {
  func.func @_linear_kernel(%arg0: i32, %arg1: i32, %arg2: memref<8x512xbf16, #tpu.memory_space<vmem>>, %arg3: memref<512x512xbf16, #tpu.memory_space<vmem>>, %arg4: memref<1x512xf32, #tpu.memory_space<vmem>>, %arg5: memref<8x512xbf16, #tpu.memory_space<vmem>>) attributes {dimension_semantics = [#tpu.dimension_semantics<parallel>, #tpu.dimension_semantics<parallel>], iteration_bounds = array<i64: 1, 1>, scalar_prefetch = 0 : i64, scratch_operands = 0 : i64, tpu.core_type = #tpu.core_type<tc>, window_params = [{transform_indices = @transform_0, window_bounds = array<i64: 8, 512>}, {transform_indices = @transform_1, window_bounds = array<i64: 512, 512>}, {transform_indices = @transform_2, window_bounds = array<i64: 1, 512>}, {transform_indices = @transform_3, window_bounds = array<i64: 8, 512>}]} {
    %c0 = arith.constant 0 : index
    %c0_0 = arith.constant 0 : index
    %0 = vector.load %arg2[%c0, %c0_0] : memref<8x512xbf16, #tpu.memory_space<vmem>>, vector<8x512xbf16>
    %c0_1 = arith.constant 0 : index
    %c0_2 = arith.constant 0 : index
    %1 = vector.load %arg3[%c0_1, %c0_2] : memref<512x512xbf16, #tpu.memory_space<vmem>>, vector<512x512xbf16>
    %cst = arith.constant dense<0.000000e+00> : vector<8x512xf32>
    %2 = tpu.matmul %0, %1, %cst {dimension_numbers = #tpu.dot_dimension_numbers<[1], [0], [0], [1], [0, 0, 1, 1], [], []>} : vector<8x512xbf16>, vector<512x512xbf16>, vector<8x512xf32> -> vector<8x512xf32>
    %c0_3 = arith.constant 0 : index
    %c0_4 = arith.constant 0 : index
    %3 = vector.load %arg4[%c0_3, %c0_4] : memref<1x512xf32, #tpu.memory_space<vmem>>, vector<1x512xf32>
    %4 = vector.broadcast %3 : vector<1x512xf32> to vector<8x512xf32>
    %5 = arith.addf %2, %4 : vector<8x512xf32>
    %cst_5 = arith.constant 0.000000e+00 : f32
    %6 = vector.broadcast %cst_5 : f32 to vector<8x512xf32>
    %7 = arith.maximumf %5, %6 : vector<8x512xf32>
    %8 = arith.truncf %7 : vector<8x512xf32> to vector<8x512xbf16>
    %c0_6 = arith.constant 0 : index
    %c0_7 = arith.constant 0 : index
    %9 = vector.load %arg5[%c0_6, %c0_7] : memref<8x512xbf16, #tpu.memory_space<vmem>>, vector<8x512xbf16>
    tpu.vector_store %arg5[%c0_6, %c0_7], %8 {strides = array<i32>} : memref<8x512xbf16, #tpu.memory_space<vmem>>, vector<8x512xbf16>,
    return
  }
  func.func @transform_0(%arg0: i32, %arg1: i32) -> (i32, i32) {
    %c0_i32 = arith.constant 0 : i32
    %c0_i32_0 = arith.constant 0 : i32
    return %arg0, %c0_i32 : i32, i32
  }
  func.func @transform_1(%arg0: i32, %arg1: i32) -> (i32, i32) {
    %c0_i32 = arith.constant 0 : i32
    %c0_i32_0 = arith.constant 0 : i32
    return %c0_i32, %arg1 : i32, i32
  }
  func.func @transform_2(%arg0: i32, %arg1: i32) -> (i32, i32) {
    %c0_i32 = arith.constant 0 : i32
    %c0_i32_0 = arith.constant 0 : i32
    return %c0_i32, %arg1 : i32, i32
  }
  func.func @transform_3(%arg0: i32, %arg1: i32) -> (i32, i32) {
    %c0_i32 = arith.constant 0 : i32
    return %arg0, %arg1 : i32, i32
  }
}

module attributes {stable_mosaic.version = 11 : i64} {
  func.func @_linear_residual_kernel(%arg0: i32, %arg1: i32, %arg2: memref<8x512xbf16, #tpu.memory_space<vmem>>, %arg3: memref<512x512xbf16, #tpu.memory_space<vmem>>, %arg4: memref<1x512xf32, #tpu.memory_space<vmem>>, %arg5: memref<8x512xf32, #tpu.memory_space<vmem>>, %arg6: memref<8x512xf32, #tpu.memory_space<vmem>>) attributes {dimension_semantics = [#tpu.dimension_semantics<parallel>, #tpu.dimension_semantics<parallel>], iteration_bounds = array<i64: 1, 1>, scalar_prefetch = 0 : i64, scratch_operands = 0 : i64, tpu.core_type = #tpu.core_type<tc>, window_params = [{transform_indices = @transform_0, window_bounds = array<i64: 8, 512>}, {transform_indices = @transform_1, window_bounds = array<i64: 512, 512>}, {transform_indices = @transform_2, window_bounds = array<i64: 1, 512>}, {transform_indices = @transform_3, window_bounds = array<i64: 8, 512>}, {transform_indices = @transform_4, window_bounds = array<i64: 8, 512>}]} {
    %c0 = arith.constant 0 : index
    %c0_0 = arith.constant 0 : index
    %0 = vector.load %arg2[%c0, %c0_0] : memref<8x512xbf16, #tpu.memory_space<vmem>>, vector<8x512xbf16>
    %c0_1 = arith.constant 0 : index
    %c0_2 = arith.constant 0 : index
    %1 = vector.load %arg3[%c0_1, %c0_2] : memref<512x512xbf16, #tpu.memory_space<vmem>>, vector<512x512xbf16>
    %cst = arith.constant dense<0.000000e+00> : vector<8x512xf32>
    %2 = tpu.matmul %0, %1, %cst {dimension_numbers = #tpu.dot_dimension_numbers<[1], [0], [0], [1], [0, 0, 1, 1], [], []>} : vector<8x512xbf16>, vector<512x512xbf16>, vector<8x512xf32> -> vector<8x512xf32>
    %c0_3 = arith.constant 0 : index
    %c0_4 = arith.constant 0 : index
    %3 = vector.load %arg4[%c0_3, %c0_4] : memref<1x512xf32, #tpu.memory_space<vmem>>, vector<1x512xf32>
    %4 = vector.broadcast %3 : vector<1x512xf32> to vector<8x512xf32>
    %5 = arith.addf %2, %4 : vector<8x512xf32>
    %c0_5 = arith.constant 0 : index
    %c0_6 = arith.constant 0 : index
    %6 = vector.load %arg5[%c0_5, %c0_6] : memref<8x512xf32, #tpu.memory_space<vmem>>, vector<8x512xf32>
    %7 = arith.addf %5, %6 : vector<8x512xf32>
    %c0_7 = arith.constant 0 : index
    %c0_8 = arith.constant 0 : index
    %8 = vector.load %arg6[%c0_7, %c0_8] : memref<8x512xf32, #tpu.memory_space<vmem>>, vector<8x512xf32>
    tpu.vector_store %arg6[%c0_7, %c0_8], %7 {strides = array<i32>} : memref<8x512xf32, #tpu.memory_space<vmem>>, vector<8x512xf32>,
    return
  }
  func.func @transform_0(%arg0: i32, %arg1: i32) -> (i32, i32) {
    %c0_i32 = arith.constant 0 : i32
    %c0_i32_0 = arith.constant 0 : i32
    return %arg0, %c0_i32 : i32, i32
  }
  func.func @transform_1(%arg0: i32, %arg1: i32) -> (i32, i32) {
    %c0_i32 = arith.constant 0 : i32
    %c0_i32_0 = arith.constant 0 : i32
    return %c0_i32, %arg1 : i32, i32
  }
  func.func @transform_2(%arg0: i32, %arg1: i32) -> (i32, i32) {
    %c0_i32 = arith.constant 0 : i32
    %c0_i32_0 = arith.constant 0 : i32
    return %c0_i32, %arg1 : i32, i32
  }
  func.func @transform_3(%arg0: i32, %arg1: i32) -> (i32, i32) {
    %c0_i32 = arith.constant 0 : i32
    return %arg0, %arg1 : i32, i32
  }
  func.func @transform_4(%arg0: i32, %arg1: i32) -> (i32, i32) {
    %c0_i32 = arith.constant 0 : i32
    return %arg0, %arg1 : i32, i32
  }
}

</mosaic_0001>

<llo_original>
// kernel: resnet_forward.2
$region0: #{resnet_forward.2}
  #allocation0 [shape = 'u32[]', space=smem, size = 0x4, offset = 0x4, fixed_abs, tag = 'smem constant byte address 0x4 - core index']
  #allocation1 [shape = 'u32[144,128]{1,0:T(1,128)}', space=vmem, size = 0x12000, scoped, tag = 'internal scratch']
  %s0 = inlined_call_operand.vmem [shape: bf16[8,512], index: 0, kind: input, shape index: {}]
  %s1 = inlined_call_operand.hbm [shape: bf16[512,512], index: 1, kind: input, shape index: {}]
  %s2 = inlined_call_operand.hbm [shape: f32[1,512], index: 2, kind: input, shape index: {}]
  %s3 = inlined_call_operand.vmem [shape: bf16[8,512], index: 3, kind: output, shape index: {}]
  %s4 = sld [smem:[#allocation0]]
  $region30: #{resnet_forward.2} parent=0
    _
  %s6 = ssub.s32 1, %s4
  %s7 = scalar_select 0, %s6, %s4
  $region1: #{resnet_forward.2} parent=0
    #allocation2 [shape = 'u8[524288]{0}', space=vmem, size = 0x80000, scoped, tag = 'input window, operand 1, single buffered']
    #allocation3 [shape = 's32[1]{0}', space=sflag, size = 0x4, scoped, tag = 'scoped memory for resnet_forward.2']
    #allocation4 [shape = 'u8[2048]{0}', space=vmem, size = 0x800, scoped, tag = 'input window, operand 2, single buffered']
    #allocation5 [shape = 's32[1]{0}', space=sflag, size = 0x4, scoped, tag = 'scoped memory for resnet_forward.2']
    %8 = vsyncpa [#allocation3], 0
    %9 = vsyncpa [#allocation5], 0
    // Predicated region
    $region2: #{resnet_forward.2} parent=1 // pred_check
      _
    $region3: #{resnet_forward.2} parent=1 // pred_check_branch
      %11 = sbr.rel (0) target = $region5
    $region4: #{resnet_forward.2} parent=1 // pred_region
      _
    $region5: #{resnet_forward.2} parent=1 // pred_fallthru
      _
    // Predicated region
    $region6: #{resnet_forward.2} parent=1 // pred_check
      _
    $region7: #{resnet_forward.2} parent=1 // pred_check_branch
      %13 = sbr.rel (0) target = $region9
    $region8: #{resnet_forward.2} parent=1 // pred_region
      %s15 = ssub.s32 16384, 16384
      %16 = vsyncadd [#allocation3], %s15
      %s17 = sshll.u32 [#allocation2], 4
      %s18 = int_to_ptr.vmem [resolvable:$true] %s17
      %23 = dma.hbm_to_vmem [thread:$0]  %s1, 16384, %s18, [#allocation3], 256, 256, 16
    $region9: #{resnet_forward.2} parent=1 // pred_fallthru
      _
    // Predicated region
    $region10: #{resnet_forward.2} parent=1 // pred_check
      _
    $region11: #{resnet_forward.2} parent=1 // pred_check_branch
      %25 = sbr.rel (0) target = $region13
    $region12: #{resnet_forward.2} parent=1 // pred_region
      %s27 = ssub.s32 64, 64
      %28 = vsyncadd [#allocation5], %s27
      %s30 = sshll.u32 [#allocation4], 4
      %s31 = int_to_ptr.vmem [resolvable:$true] %s30
      %33 = dma.hbm_to_vmem [thread:$0]  %s2, 64, %s31, [#allocation5]
    $region13: #{resnet_forward.2} parent=1 // pred_fallthru
      _
    // Predicated region
    $region14: #{resnet_forward.2} parent=1 // pred_check
      _
    $region15: #{resnet_forward.2} parent=1 // pred_check_branch
      %35 = sbr.rel (0) target = $region17
    $region16: #{resnet_forward.2} parent=1 // pred_region
      %36 = dma.done [#allocation3], 16384
    $region17: #{resnet_forward.2} parent=1 // pred_fallthru
      _
    // Predicated region
    $region18: #{resnet_forward.2} parent=1 // pred_check
      _
    $region19: #{resnet_forward.2} parent=1 // pred_check_branch
      %38 = sbr.rel (0) target = $region21
    $region20: #{resnet_forward.2} parent=1 // pred_region
      %39 = dma.done [#allocation5], 64
    $region21: #{resnet_forward.2} parent=1 // pred_fallthru
      _
    %v40 = vld [vmem:[%s0] sm:$0xff]
    %v41 = vld [vmem:[%s0 + $0x8] sm:$0xff]
    %v42 = vld [vmem:[#allocation2] sm:$0xff]
    %v43 = vld [vmem:[#allocation2 + $0x8] sm:$0xff]
    %v44 = vld [vmem:[#allocation2 + $0x10] sm:$0xff]
    %v45 = vld [vmem:[#allocation2 + $0x18] sm:$0xff]
    %v46 = vld [vmem:[#allocation2 + $0x20] sm:$0xff]
    %v47 = vld [vmem:[#allocation2 + $0x28] sm:$0xff]
    %v48 = vld [vmem:[#allocation2 + $0x30] sm:$0xff]
    %v49 = vld [vmem:[#allocation2 + $0x38] sm:$0xff]
    %v50 = vld [vmem:[#allocation2 + $0x40] sm:$0xff]
    %v51 = vld [vmem:[#allocation2 + $0x48] sm:$0xff]
    %v52 = vld [vmem:[#allocation2 + $0x50] sm:$0xff]
    %v53 = vld [vmem:[#allocation2 + $0x58] sm:$0xff]
    %v54 = vld [vmem:[#allocation2 + $0x60] sm:$0xff]
    %v55 = vld [vmem:[#allocation2 + $0x68] sm:$0xff]
    %v56 = vld [vmem:[#allocation2 + $0x70] sm:$0xff]
    %v57 = vld [vmem:[#allocation2 + $0x78] sm:$0xff]
    %v58 = vld [vmem:[#allocation2 + $0x80] sm:$0xff]
    %v59 = vld [vmem:[#allocation2 + $0x88] sm:$0xff]
    %v60 = vld [vmem:[#allocation2 + $0x90] sm:$0xff]
    %v61 = vld [vmem:[#allocation2 + $0x98] sm:$0xff]
    %v62 = vld [vmem:[#allocation2 + $0xa0] sm:$0xff]
    %v63 = vld [vmem:[#allocation2 + $0xa8] sm:$0xff]
    %v64 = vld [vmem:[#allocation2 + $0xb0] sm:$0xff]
    %v65 = vld [vmem:[#allocation2 + $0xb8] sm:$0xff]
    %v66 = vld [vmem:[#allocation2 + $0xc0] sm:$0xff]
    %v67 = vld [vmem:[#allocation2 + $0xc8] sm:$0xff]
    %v68 = vld [vmem:[#allocation2 + $0xd0] sm:$0xff]
    %v69 = vld [vmem:[#allocation2 + $0xd8] sm:$0xff]
    %v70 = vld [vmem:[#allocation2 + $0xe0] sm:$0xff]
    %v71 = vld [vmem:[#allocation2 + $0xe8] sm:$0xff]
    %v72 = vld [vmem:[#allocation2 + $0xf0] sm:$0xff]
    %v73 = vld [vmem:[#allocation2 + $0xf8] sm:$0xff]
    %v74 = vld [vmem:[#allocation2 + $0x100] sm:$0xff]
    %v75 = vld [vmem:[#allocation2 + $0x108] sm:$0xff]
    %v76 = vld [vmem:[#allocation2 + $0x110] sm:$0xff]
    %v77 = vld [vmem:[#allocation2 + $0x118] sm:$0xff]
    %v78 = vld [vmem:[#allocation2 + $0x120] sm:$0xff]
    %v79 = vld [vmem:[#allocation2 + $0x128] sm:$0xff]
    %v80 = vld [vmem:[#allocation2 + $0x130] sm:$0xff]
    %v81 = vld [vmem:[#allocation2 + $0x138] sm:$0xff]
    %v82 = vld [vmem:[#allocation2 + $0x140] sm:$0xff]
    %v83 = vld [vmem:[#allocation2 + $0x148] sm:$0xff]
    %v84 = vld [vmem:[#allocation2 + $0x150] sm:$0xff]
    %v85 = vld [vmem:[#allocation2 + $0x158] sm:$0xff]
    %v86 = vld [vmem:[#allocation2 + $0x160] sm:$0xff]
    %v87 = vld [vmem:[#allocation2 + $0x168] sm:$0xff]
    %v88 = vld [vmem:[#allocation2 + $0x170] sm:$0xff]
    %v89 = vld [vmem:[#allocation2 + $0x178] sm:$0xff]
    %v90 = vld [vmem:[#allocation2 + $0x180] sm:$0xff]
    %v91 = vld [vmem:[#allocation2 + $0x188] sm:$0xff]
    %v92 = vld [vmem:[#allocation2 + $0x190] sm:$0xff]
    %v93 = vld [vmem:[#allocation2 + $0x198] sm:$0xff]
    %v94 = vld [vmem:[#allocation2 + $0x1a0] sm:$0xff]
    %v95 = vld [vmem:[#allocation2 + $0x1a8] sm:$0xff]
    %v96 = vld [vmem:[#allocation2 + $0x1b0] sm:$0xff]
    %v97 = vld [vmem:[#allocation2 + $0x1b8] sm:$0xff]
    %v98 = vld [vmem:[#allocation2 + $0x1c0] sm:$0xff]
    %v99 = vld [vmem:[#allocation2 + $0x1c8] sm:$0xff]
    %v100 = vld [vmem:[#allocation2 + $0x1d0] sm:$0xff]
    %v101 = vld [vmem:[#allocation2 + $0x1d8] sm:$0xff]
    %v102 = vld [vmem:[#allocation2 + $0x1e0] sm:$0xff]
    %v103 = vld [vmem:[#allocation2 + $0x1e8] sm:$0xff]
    %v104 = vld [vmem:[#allocation2 + $0x1f0] sm:$0xff]
    %v105 = vld [vmem:[#allocation2 + $0x1f8] sm:$0xff]
    %v106 = vld [vmem:[#allocation2 + $0x200] sm:$0xff]
    %v107 = vld [vmem:[#allocation2 + $0x208] sm:$0xff]
    %v108 = vld [vmem:[#allocation2 + $0x210] sm:$0xff]
    %v109 = vld [vmem:[#allocation2 + $0x218] sm:$0xff]
    %v110 = vld [vmem:[#allocation2 + $0x220] sm:$0xff]
    %v111 = vld [vmem:[#allocation2 + $0x228] sm:$0xff]
    %v112 = vld [vmem:[#allocation2 + $0x230] sm:$0xff]
    %v113 = vld [vmem:[#allocation2 + $0x238] sm:$0xff]
    %v114 = vld [vmem:[#allocation2 + $0x240] sm:$0xff]
    %v115 = vld [vmem:[#allocation2 + $0x248] sm:$0xff]
    %v116 = vld [vmem:[#allocation2 + $0x250] sm:$0xff]
    %v117 = vld [vmem:[#allocation2 + $0x258] sm:$0xff]
    %v118 = vld [vmem:[#allocation2 + $0x260] sm:$0xff]
    %v119 = vld [vmem:[#allocation2 + $0x268] sm:$0xff]
    %v120 = vld [vmem:[#allocation2 + $0x270] sm:$0xff]
    %v121 = vld [vmem:[#allocation2 + $0x278] sm:$0xff]
    %v122 = vld [vmem:[#allocation2 + $0x280] sm:$0xff]
    %v123 = vld [vmem:[#allocation2 + $0x288] sm:$0xff]
    %v124 = vld [vmem:[#allocation2 + $0x290] sm:$0xff]
    %v125 = vld [vmem:[#allocation2 + $0x298] sm:$0xff]
    %v126 = vld [vmem:[#allocation2 + $0x2a0] sm:$0xff]
    %v127 = vld [vmem:[#allocation2 + $0x2a8] sm:$0xff]
    %v128 = vld [vmem:[#allocation2 + $0x2b0] sm:$0xff]
    %v129 = vld [vmem:[#allocation2 + $0x2b8] sm:$0xff]
    %v130 = vld [vmem:[#allocation2 + $0x2c0] sm:$0xff]
    %v131 = vld [vmem:[#allocation2 + $0x2c8] sm:$0xff]
    %v132 = vld [vmem:[#allocation2 + $0x2d0] sm:$0xff]
    %v133 = vld [vmem:[#allocation2 + $0x2d8] sm:$0xff]
    %v134 = vld [vmem:[#allocation2 + $0x2e0] sm:$0xff]
    %v135 = vld [vmem:[#allocation2 + $0x2e8] sm:$0xff]
    %v136 = vld [vmem:[#allocation2 + $0x2f0] sm:$0xff]
    %v137 = vld [vmem:[#allocation2 + $0x2f8] sm:$0xff]
    %v138 = vld [vmem:[#allocation2 + $0x300] sm:$0xff]
    %v139 = vld [vmem:[#allocation2 + $0x308] sm:$0xff]
    %v140 = vld [vmem:[#allocation2 + $0x310] sm:$0xff]
    %v141 = vld [vmem:[#allocation2 + $0x318] sm:$0xff]
    %v142 = vld [vmem:[#allocation2 + $0x320] sm:$0xff]
    %v143 = vld [vmem:[#allocation2 + $0x328] sm:$0xff]
    %v144 = vld [vmem:[#allocation2 + $0x330] sm:$0xff]
    %v145 = vld [vmem:[#allocation2 + $0x338] sm:$0xff]
    %v146 = vld [vmem:[#allocation2 + $0x340] sm:$0xff]
    %v147 = vld [vmem:[#allocation2 + $0x348] sm:$0xff]
    %v148 = vld [vmem:[#allocation2 + $0x350] sm:$0xff]
    %v149 = vld [vmem:[#allocation2 + $0x358] sm:$0xff]
    %v150 = vld [vmem:[#allocation2 + $0x360] sm:$0xff]
    %v151 = vld [vmem:[#allocation2 + $0x368] sm:$0xff]
    %v152 = vld [vmem:[#allocation2 + $0x370] sm:$0xff]
    %v153 = vld [vmem:[#allocation2 + $0x378] sm:$0xff]
    %v154 = vld [vmem:[#allocation2 + $0x380] sm:$0xff]
    %v155 = vld [vmem:[#allocation2 + $0x388] sm:$0xff]
    %v156 = vld [vmem:[#allocation2 + $0x390] sm:$0xff]
    %v157 = vld [vmem:[#allocation2 + $0x398] sm:$0xff]
    %v158 = vld [vmem:[#allocation2 + $0x3a0] sm:$0xff]
    %v159 = vld [vmem:[#allocation2 + $0x3a8] sm:$0xff]
    %v160 = vld [vmem:[#allocation2 + $0x3b0] sm:$0xff]
    %v161 = vld [vmem:[#allocation2 + $0x3b8] sm:$0xff]
    %v162 = vld [vmem:[#allocation2 + $0x3c0] sm:$0xff]
    %v163 = vld [vmem:[#allocation2 + $0x3c8] sm:$0xff]
    %v164 = vld [vmem:[#allocation2 + $0x3d0] sm:$0xff]
    %v165 = vld [vmem:[#allocation2 + $0x3d8] sm:$0xff]
    %v166 = vld [vmem:[#allocation2 + $0x3e0] sm:$0xff]
    %v167 = vld [vmem:[#allocation2 + $0x3e8] sm:$0xff]
    %v168 = vld [vmem:[#allocation2 + $0x3f0] sm:$0xff]
    %v169 = vld [vmem:[#allocation2 + $0x3f8] sm:$0xff]
    %v170 = vld [vmem:[#allocation4] sm:$0xf]
    %v172 = vlaneseq
    %v173 = vshrl.u32 %v172, 7
    %v174 = vsub.s32 0, %v173
    %v175 = vrot.slane %v170, %v174
    %v176 = vlaneseq
    %v177 = vshrl.u32 %v176, 7
    %v178 = vsub.s32 1, %v177
    %v179 = vrot.slane %v170, %v178
    %v180 = vlaneseq
    %v181 = vshrl.u32 %v180, 7
    %v182 = vsub.s32 2, %v181
    %v183 = vrot.slane %v170, %v182
    %v184 = vlaneseq
    %v185 = vshrl.u32 %v184, 7
    %v186 = vsub.s32 3, %v185
    %v187 = vrot.slane %v170, %v186
    %v194 = vunpack.c.l.b16 %v40
    %v195 = vunpack.c.h.b16 %v40
    %v196 = vunpack.c.l.b16 %v41
    %v197 = vunpack.c.h.b16 %v41
    %v198 = vpack.c.b16 %v194, %v194
    %v199 = vpack.c.b16 %v195, %v195
    %v200 = vpack.c.b16 %v196, %v196
    %v201 = vpack.c.b16 %v197, %v197
    %v334 = vunpack.c.l.b16 %v42
    %v335 = vunpack.c.h.b16 %v42
    %v336 = vunpack.c.l.b16 %v43
    %v337 = vunpack.c.h.b16 %v43
    %v338 = vunpack.c.l.b16 %v44
    %v339 = vunpack.c.h.b16 %v44
    %v340 = vunpack.c.l.b16 %v45
    %v341 = vunpack.c.h.b16 %v45
    %v342 = vunpack.c.l.b16 %v46
    %v343 = vunpack.c.h.b16 %v46
    %v344 = vunpack.c.l.b16 %v47
    %v345 = vunpack.c.h.b16 %v47
    %v346 = vunpack.c.l.b16 %v48
    %v347 = vunpack.c.h.b16 %v48
    %v348 = vunpack.c.l.b16 %v49
    %v349 = vunpack.c.h.b16 %v49
    %v350 = vunpack.c.l.b16 %v50
    %v351 = vunpack.c.h.b16 %v50
    %v352 = vunpack.c.l.b16 %v51
    %v353 = vunpack.c.h.b16 %v51
    %v354 = vunpack.c.l.b16 %v52
    %v355 = vunpack.c.h.b16 %v52
    %v356 = vunpack.c.l.b16 %v53
    %v357 = vunpack.c.h.b16 %v53
    %v358 = vunpack.c.l.b16 %v54
    %v359 = vunpack.c.h.b16 %v54
    %v360 = vunpack.c.l.b16 %v55
    %v361 = vunpack.c.h.b16 %v55
    %v362 = vunpack.c.l.b16 %v56
    %v363 = vunpack.c.h.b16 %v56
    %v364 = vunpack.c.l.b16 %v57
    %v365 = vunpack.c.h.b16 %v57
    %v366 = vunpack.c.l.b16 %v58
    %v367 = vunpack.c.h.b16 %v58
    %v368 = vunpack.c.l.b16 %v59
    %v369 = vunpack.c.h.b16 %v59
    %v370 = vunpack.c.l.b16 %v60
    %v371 = vunpack.c.h.b16 %v60
    %v372 = vunpack.c.l.b16 %v61
    %v373 = vunpack.c.h.b16 %v61
    %v374 = vunpack.c.l.b16 %v62
    %v375 = vunpack.c.h.b16 %v62
    %v376 = vunpack.c.l.b16 %v63
    %v377 = vunpack.c.h.b16 %v63
    %v378 = vunpack.c.l.b16 %v64
    %v379 = vunpack.c.h.b16 %v64
    %v380 = vunpack.c.l.b16 %v65
    %v381 = vunpack.c.h.b16 %v65
    %v382 = vunpack.c.l.b16 %v66
    %v383 = vunpack.c.h.b16 %v66
    %v384 = vunpack.c.l.b16 %v67
    %v385 = vunpack.c.h.b16 %v67
    %v386 = vunpack.c.l.b16 %v68
    %v387 = vunpack.c.h.b16 %v68
    %v388 = vunpack.c.l.b16 %v69
    %v389 = vunpack.c.h.b16 %v69
    %v390 = vunpack.c.l.b16 %v70
    %v391 = vunpack.c.h.b16 %v70
    %v392 = vunpack.c.l.b16 %v71
    %v393 = vunpack.c.h.b16 %v71
    %v394 = vunpack.c.l.b16 %v72
    %v395 = vunpack.c.h.b16 %v72
    %v396 = vunpack.c.l.b16 %v73
    %v397 = vunpack.c.h.b16 %v73
    %v398 = vunpack.c.l.b16 %v74
    %v399 = vunpack.c.h.b16 %v74
    %v400 = vunpack.c.l.b16 %v75
    %v401 = vunpack.c.h.b16 %v75
    %v402 = vunpack.c.l.b16 %v76
    %v403 = vunpack.c.h.b16 %v76
    %v404 = vunpack.c.l.b16 %v77
    %v405 = vunpack.c.h.b16 %v77
    %v406 = vunpack.c.l.b16 %v78
    %v407 = vunpack.c.h.b16 %v78
    %v408 = vunpack.c.l.b16 %v79
    %v409 = vunpack.c.h.b16 %v79
    %v410 = vunpack.c.l.b16 %v80
    %v411 = vunpack.c.h.b16 %v80
    %v412 = vunpack.c.l.b16 %v81
    %v413 = vunpack.c.h.b16 %v81
    %v414 = vunpack.c.l.b16 %v82
    %v415 = vunpack.c.h.b16 %v82
    %v416 = vunpack.c.l.b16 %v83
    %v417 = vunpack.c.h.b16 %v83
    %v418 = vunpack.c.l.b16 %v84
    %v419 = vunpack.c.h.b16 %v84
    %v420 = vunpack.c.l.b16 %v85
    %v421 = vunpack.c.h.b16 %v85
    %v422 = vunpack.c.l.b16 %v86
    %v423 = vunpack.c.h.b16 %v86
    %v424 = vunpack.c.l.b16 %v87
    %v425 = vunpack.c.h.b16 %v87
    %v426 = vunpack.c.l.b16 %v88
    %v427 = vunpack.c.h.b16 %v88
    %v428 = vunpack.c.l.b16 %v89
    %v429 = vunpack.c.h.b16 %v89
    %v430 = vunpack.c.l.b16 %v90
    %v431 = vunpack.c.h.b16 %v90
    %v432 = vunpack.c.l.b16 %v91
    %v433 = vunpack.c.h.b16 %v91
    %v434 = vunpack.c.l.b16 %v92
    %v435 = vunpack.c.h.b16 %v92
    %v436 = vunpack.c.l.b16 %v93
    %v437 = vunpack.c.h.b16 %v93
    %v438 = vunpack.c.l.b16 %v94
    %v439 = vunpack.c.h.b16 %v94
    %v440 = vunpack.c.l.b16 %v95
    %v441 = vunpack.c.h.b16 %v95
    %v442 = vunpack.c.l.b16 %v96
    %v443 = vunpack.c.h.b16 %v96
    %v444 = vunpack.c.l.b16 %v97
    %v445 = vunpack.c.h.b16 %v97
    %v446 = vunpack.c.l.b16 %v98
    %v447 = vunpack.c.h.b16 %v98
    %v448 = vunpack.c.l.b16 %v99
    %v449 = vunpack.c.h.b16 %v99
    %v450 = vunpack.c.l.b16 %v100
    %v451 = vunpack.c.h.b16 %v100
    %v452 = vunpack.c.l.b16 %v101
    %v453 = vunpack.c.h.b16 %v101
    %v454 = vunpack.c.l.b16 %v102
    %v455 = vunpack.c.h.b16 %v102
    %v456 = vunpack.c.l.b16 %v103
    %v457 = vunpack.c.h.b16 %v103
    %v458 = vunpack.c.l.b16 %v104
    %v459 = vunpack.c.h.b16 %v104
    %v460 = vunpack.c.l.b16 %v105
    %v461 = vunpack.c.h.b16 %v105
    %v462 = vunpack.c.l.b16 %v106
    %v463 = vunpack.c.h.b16 %v106
    %v464 = vunpack.c.l.b16 %v107
    %v465 = vunpack.c.h.b16 %v107
    %v466 = vunpack.c.l.b16 %v108
    %v467 = vunpack.c.h.b16 %v108
    %v468 = vunpack.c.l.b16 %v109
    %v469 = vunpack.c.h.b16 %v109
    %v470 = vunpack.c.l.b16 %v110
    %v471 = vunpack.c.h.b16 %v110
    %v472 = vunpack.c.l.b16 %v111
    %v473 = vunpack.c.h.b16 %v111
    %v474 = vunpack.c.l.b16 %v112
    %v475 = vunpack.c.h.b16 %v112
    %v476 = vunpack.c.l.b16 %v113
    %v477 = vunpack.c.h.b16 %v113
    %v478 = vunpack.c.l.b16 %v114
    %v479 = vunpack.c.h.b16 %v114
    %v480 = vunpack.c.l.b16 %v115
    %v481 = vunpack.c.h.b16 %v115
    %v482 = vunpack.c.l.b16 %v116
    %v483 = vunpack.c.h.b16 %v116
    %v484 = vunpack.c.l.b16 %v117
    %v485 = vunpack.c.h.b16 %v117
    %v486 = vunpack.c.l.b16 %v118
    %v487 = vunpack.c.h.b16 %v118
    %v488 = vunpack.c.l.b16 %v119
    %v489 = vunpack.c.h.b16 %v119
    %v490 = vunpack.c.l.b16 %v120
    %v491 = vunpack.c.h.b16 %v120
    %v492 = vunpack.c.l.b16 %v121
    %v493 = vunpack.c.h.b16 %v121
    %v494 = vunpack.c.l.b16 %v122
    %v495 = vunpack.c.h.b16 %v122
    %v496 = vunpack.c.l.b16 %v123
    %v497 = vunpack.c.h.b16 %v123
    %v498 = vunpack.c.l.b16 %v124
    %v499 = vunpack.c.h.b16 %v124
    %v500 = vunpack.c.l.b16 %v125
    %v501 = vunpack.c.h.b16 %v125
    %v502 = vunpack.c.l.b16 %v126
    %v503 = vunpack.c.h.b16 %v126
    %v504 = vunpack.c.l.b16 %v127
    %v505 = vunpack.c.h.b16 %v127
    %v506 = vunpack.c.l.b16 %v128
    %v507 = vunpack.c.h.b16 %v128
    %v508 = vunpack.c.l.b16 %v129
    %v509 = vunpack.c.h.b16 %v129
    %v510 = vunpack.c.l.b16 %v130
    %v511 = vunpack.c.h.b16 %v130
    %v512 = vunpack.c.l.b16 %v131
    %v513 = vunpack.c.h.b16 %v131
    %v514 = vunpack.c.l.b16 %v132
    %v515 = vunpack.c.h.b16 %v132
    %v516 = vunpack.c.l.b16 %v133
    %v517 = vunpack.c.h.b16 %v133
    %v518 = vunpack.c.l.b16 %v134
    %v519 = vunpack.c.h.b16 %v134
    %v520 = vunpack.c.l.b16 %v135
    %v521 = vunpack.c.h.b16 %v135
    %v522 = vunpack.c.l.b16 %v136
    %v523 = vunpack.c.h.b16 %v136
    %v524 = vunpack.c.l.b16 %v137
    %v525 = vunpack.c.h.b16 %v137
    %v526 = vunpack.c.l.b16 %v138
    %v527 = vunpack.c.h.b16 %v138
    %v528 = vunpack.c.l.b16 %v139
    %v529 = vunpack.c.h.b16 %v139
    %v530 = vunpack.c.l.b16 %v140
    %v531 = vunpack.c.h.b16 %v140
    %v532 = vunpack.c.l.b16 %v141
    %v533 = vunpack.c.h.b16 %v141
    %v534 = vunpack.c.l.b16 %v142
    %v535 = vunpack.c.h.b16 %v142
    %v536 = vunpack.c.l.b16 %v143
    %v537 = vunpack.c.h.b16 %v143
    %v538 = vunpack.c.l.b16 %v144
    %v539 = vunpack.c.h.b16 %v144
    %v540 = vunpack.c.l.b16 %v145
    %v541 = vunpack.c.h.b16 %v145
    %v542 = vunpack.c.l.b16 %v146
    %v543 = vunpack.c.h.b16 %v146
    %v544 = vunpack.c.l.b16 %v147
    %v545 = vunpack.c.h.b16 %v147
    %v546 = vunpack.c.l.b16 %v148
    %v547 = vunpack.c.h.b16 %v148
    %v548 = vunpack.c.l.b16 %v149
    %v549 = vunpack.c.h.b16 %v149
    %v550 = vunpack.c.l.b16 %v150
    %v551 = vunpack.c.h.b16 %v150
    %v552 = vunpack.c.l.b16 %v151
    %v553 = vunpack.c.h.b16 %v151
    %v554 = vunpack.c.l.b16 %v152
    %v555 = vunpack.c.h.b16 %v152
    %v556 = vunpack.c.l.b16 %v153
    %v557 = vunpack.c.h.b16 %v153
    %v558 = vunpack.c.l.b16 %v154
    %v559 = vunpack.c.h.b16 %v154
    %v560 = vunpack.c.l.b16 %v155
    %v561 = vunpack.c.h.b16 %v155
    %v562 = vunpack.c.l.b16 %v156
    %v563 = vunpack.c.h.b16 %v156
    %v564 = vunpack.c.l.b16 %v157
    %v565 = vunpack.c.h.b16 %v157
    %v566 = vunpack.c.l.b16 %v158
    %v567 = vunpack.c.h.b16 %v158
    %v568 = vunpack.c.l.b16 %v159
    %v569 = vunpack.c.h.b16 %v159
    %v570 = vunpack.c.l.b16 %v160
    %v571 = vunpack.c.h.b16 %v160
    %v572 = vunpack.c.l.b16 %v161
    %v573 = vunpack.c.h.b16 %v161
    %v574 = vunpack.c.l.b16 %v162
    %v575 = vunpack.c.h.b16 %v162
    %v576 = vunpack.c.l.b16 %v163
    %v577 = vunpack.c.h.b16 %v163
    %v578 = vunpack.c.l.b16 %v164
    %v579 = vunpack.c.h.b16 %v164
    %v580 = vunpack.c.l.b16 %v165
    %v581 = vunpack.c.h.b16 %v165
    %v582 = vunpack.c.l.b16 %v166
    %v583 = vunpack.c.h.b16 %v166
    %v584 = vunpack.c.l.b16 %v167
    %v585 = vunpack.c.h.b16 %v167
    %v586 = vunpack.c.l.b16 %v168
    %v587 = vunpack.c.h.b16 %v168
    %v588 = vunpack.c.l.b16 %v169
    %v589 = vunpack.c.h.b16 %v169
    %v590 = vpack.c.b16 %v338, %v334
    %v591 = vpack.c.b16 %v339, %v335
    %v592 = vpack.c.b16 %v340, %v336
    %v593 = vpack.c.b16 %v341, %v337
    %v594 = vpack.c.b16 %v346, %v342
    %v595 = vpack.c.b16 %v347, %v343
    %v596 = vpack.c.b16 %v348, %v344
    %v597 = vpack.c.b16 %v349, %v345
    %v598 = vpack.c.b16 %v354, %v350
    %v599 = vpack.c.b16 %v355, %v351
    %v600 = vpack.c.b16 %v356, %v352
    %v601 = vpack.c.b16 %v357, %v353
    %v602 = vpack.c.b16 %v362, %v358
    %v603 = vpack.c.b16 %v363, %v359
    %v604 = vpack.c.b16 %v364, %v360
    %v605 = vpack.c.b16 %v365, %v361
    %v606 = vpack.c.b16 %v370, %v366
    %v607 = vpack.c.b16 %v371, %v367
    %v608 = vpack.c.b16 %v372, %v368
    %v609 = vpack.c.b16 %v373, %v369
    %v610 = vpack.c.b16 %v378, %v374
    %v611 = vpack.c.b16 %v379, %v375
    %v612 = vpack.c.b16 %v380, %v376
    %v613 = vpack.c.b16 %v381, %v377
    %v614 = vpack.c.b16 %v386, %v382
    %v615 = vpack.c.b16 %v387, %v383
    %v616 = vpack.c.b16 %v388, %v384
    %v617 = vpack.c.b16 %v389, %v385
    %v618 = vpack.c.b16 %v394, %v390
    %v619 = vpack.c.b16 %v395, %v391
    %v620 = vpack.c.b16 %v396, %v392
    %v621 = vpack.c.b16 %v397, %v393
    %v622 = vpack.c.b16 %v402, %v398
    %v623 = vpack.c.b16 %v403, %v399
    %v624 = vpack.c.b16 %v404, %v400
    %v625 = vpack.c.b16 %v405, %v401
    %v626 = vpack.c.b16 %v410, %v406
    %v627 = vpack.c.b16 %v411, %v407
    %v628 = vpack.c.b16 %v412, %v408
    %v629 = vpack.c.b16 %v413, %v409
    %v630 = vpack.c.b16 %v418, %v414
    %v631 = vpack.c.b16 %v419, %v415
    %v632 = vpack.c.b16 %v420, %v416
    %v633 = vpack.c.b16 %v421, %v417
    %v634 = vpack.c.b16 %v426, %v422
    %v635 = vpack.c.b16 %v427, %v423
    %v636 = vpack.c.b16 %v428, %v424
    %v637 = vpack.c.b16 %v429, %v425
    %v638 = vpack.c.b16 %v434, %v430
    %v639 = vpack.c.b16 %v435, %v431
    %v640 = vpack.c.b16 %v436, %v432
    %v641 = vpack.c.b16 %v437, %v433
    %v642 = vpack.c.b16 %v442, %v438
    %v643 = vpack.c.b16 %v443, %v439
    %v644 = vpack.c.b16 %v444, %v440
    %v645 = vpack.c.b16 %v445, %v441
    %v646 = vpack.c.b16 %v450, %v446
    %v647 = vpack.c.b16 %v451, %v447
    %v648 = vpack.c.b16 %v452, %v448
    %v649 = vpack.c.b16 %v453, %v449
    %v650 = vpack.c.b16 %v458, %v454
    %v651 = vpack.c.b16 %v459, %v455
    %v652 = vpack.c.b16 %v460, %v456
    %v653 = vpack.c.b16 %v461, %v457
    %v654 = vpack.c.b16 %v466, %v462
    %v655 = vpack.c.b16 %v467, %v463
    %v656 = vpack.c.b16 %v468, %v464
    %v657 = vpack.c.b16 %v469, %v465
    %v658 = vpack.c.b16 %v474, %v470
    %v659 = vpack.c.b16 %v475, %v471
    %v660 = vpack.c.b16 %v476, %v472
    %v661 = vpack.c.b16 %v477, %v473
    %v662 = vpack.c.b16 %v482, %v478
    %v663 = vpack.c.b16 %v483, %v479
    %v664 = vpack.c.b16 %v484, %v480
    %v665 = vpack.c.b16 %v485, %v481
    %v666 = vpack.c.b16 %v490, %v486
    %v667 = vpack.c.b16 %v491, %v487
    %v668 = vpack.c.b16 %v492, %v488
    %v669 = vpack.c.b16 %v493, %v489
    %v670 = vpack.c.b16 %v498, %v494
    %v671 = vpack.c.b16 %v499, %v495
    %v672 = vpack.c.b16 %v500, %v496
    %v673 = vpack.c.b16 %v501, %v497
    %v674 = vpack.c.b16 %v506, %v502
    %v675 = vpack.c.b16 %v507, %v503
    %v676 = vpack.c.b16 %v508, %v504
    %v677 = vpack.c.b16 %v509, %v505
    %v678 = vpack.c.b16 %v514, %v510
    %v679 = vpack.c.b16 %v515, %v511
    %v680 = vpack.c.b16 %v516, %v512
    %v681 = vpack.c.b16 %v517, %v513
    %v682 = vpack.c.b16 %v522, %v518
    %v683 = vpack.c.b16 %v523, %v519
    %v684 = vpack.c.b16 %v524, %v520
    %v685 = vpack.c.b16 %v525, %v521
    %v686 = vpack.c.b16 %v530, %v526
    %v687 = vpack.c.b16 %v531, %v527
    %v688 = vpack.c.b16 %v532, %v528
    %v689 = vpack.c.b16 %v533, %v529
    %v690 = vpack.c.b16 %v538, %v534
    %v691 = vpack.c.b16 %v539, %v535
    %v692 = vpack.c.b16 %v540, %v536
    %v693 = vpack.c.b16 %v541, %v537
    %v694 = vpack.c.b16 %v546, %v542
    %v695 = vpack.c.b16 %v547, %v543
    %v696 = vpack.c.b16 %v548, %v544
    %v697 = vpack.c.b16 %v549, %v545
    %v698 = vpack.c.b16 %v554, %v550
    %v699 = vpack.c.b16 %v555, %v551
    %v700 = vpack.c.b16 %v556, %v552
    %v701 = vpack.c.b16 %v557, %v553
    %v702 = vpack.c.b16 %v562, %v558
    %v703 = vpack.c.b16 %v563, %v559
    %v704 = vpack.c.b16 %v564, %v560
    %v705 = vpack.c.b16 %v565, %v561
    %v706 = vpack.c.b16 %v570, %v566
    %v707 = vpack.c.b16 %v571, %v567
    %v708 = vpack.c.b16 %v572, %v568
    %v709 = vpack.c.b16 %v573, %v569
    %v710 = vpack.c.b16 %v578, %v574
    %v711 = vpack.c.b16 %v579, %v575
    %v712 = vpack.c.b16 %v580, %v576
    %v713 = vpack.c.b16 %v581, %v577
    %v714 = vpack.c.b16 %v586, %v582
    %v715 = vpack.c.b16 %v587, %v583
    %v716 = vpack.c.b16 %v588, %v584
    %v717 = vpack.c.b16 %v589, %v585
    %846 = vmatprep.subr.bf16.mxu0 %v619
    %847 = vmatpush1.bf16.msra.mxu0 %v618
    %848 = vmatprep.subr.bf16.mxu0 %v615
    %849 = vmatpush1.bf16.msra.mxu0 %v614
    %850 = vmatprep.subr.bf16.mxu0 %v611
    %851 = vmatpush1.bf16.msra.mxu0 %v610
    %852 = vmatprep.subr.bf16.mxu0 %v607
    %853 = vmatpush1.bf16.msra.mxu0 %v606
    %854 = vmatprep.subr.bf16.mxu0 %v603
    %855 = vmatpush1.bf16.msra.mxu0 %v602
    %856 = vmatprep.subr.bf16.mxu0 %v599
    %857 = vmatpush1.bf16.msra.mxu0 %v598
    %858 = vmatprep.subr.bf16.mxu0 %v595
    %859 = vmatpush1.bf16.msra.mxu0 %v594
    %860 = vmatprep.subr.bf16.mxu0 %v591
    %861 = vmatpush1.bf16.msra.mxu0 %v590
    %862 = vmatprep.subr.bf16.mxu0 %v651
    %863 = vmatpush2.bf16.msra.mxu0 %v650
    %864 = vmatprep.subr.bf16.mxu0 %v647
    %865 = vmatpush2.bf16.msra.mxu0 %v646
    %866 = vmatprep.subr.bf16.mxu0 %v643
    %867 = vmatpush2.bf16.msra.mxu0 %v642
    %868 = vmatprep.subr.bf16.mxu0 %v639
    %869 = vmatpush2.bf16.msra.mxu0 %v638
    %870 = vmatprep.subr.bf16.mxu0 %v635
    %871 = vmatpush2.bf16.msra.mxu0 %v634
    %872 = vmatprep.subr.bf16.mxu0 %v631
    %873 = vmatpush2.bf16.msra.mxu0 %v630
    %874 = vmatprep.subr.bf16.mxu0 %v627
    %875 = vmatpush2.bf16.msra.mxu0 %v626
    %876 = vmatprep.subr.bf16.mxu0 %v623
    %877 = vmatpush2.bf16.msra.mxu0 %v622
    %878 = vmatprep.mubr.bf16.mxu0 %v199
    %879 = vmatmul.mubr.bf16.gmra.mxu0 %v198
    %v880 = vpop.f32.mrf.mxu0
    %v881 = vadd.f32 %v175, %v880
    %v882 = vpop.f32.mrf.mxu0
    %v883 = vadd.f32 %v179, %v882
    %v884 = vpop.f32.mrf.mxu0
    %v885 = vpop.f32.mrf.mxu0
    %886 = vdwg.mxu0
    %887 = vmatprep.subr.bf16.mxu0 %v683
    %888 = vmatpush1.bf16.msra.mxu0 %v682
    %889 = vmatprep.subr.bf16.mxu0 %v679
    %890 = vmatpush1.bf16.msra.mxu0 %v678
    %891 = vmatprep.subr.bf16.mxu0 %v675
    %892 = vmatpush1.bf16.msra.mxu0 %v674
    %893 = vmatprep.subr.bf16.mxu0 %v671
    %894 = vmatpush1.bf16.msra.mxu0 %v670
    %895 = vmatprep.subr.bf16.mxu0 %v667
    %896 = vmatpush1.bf16.msra.mxu0 %v666
    %897 = vmatprep.subr.bf16.mxu0 %v663
    %898 = vmatpush1.bf16.msra.mxu0 %v662
    %899 = vmatprep.subr.bf16.mxu0 %v659
    %900 = vmatpush1.bf16.msra.mxu0 %v658
    %901 = vmatprep.subr.bf16.mxu0 %v655
    %902 = vmatpush1.bf16.msra.mxu0 %v654
    %903 = vmatprep.subr.bf16.mxu0 %v715
    %904 = vmatpush2.bf16.msra.mxu0 %v714
    %905 = vmatprep.subr.bf16.mxu0 %v711
    %906 = vmatpush2.bf16.msra.mxu0 %v710
    %907 = vmatprep.subr.bf16.mxu0 %v707
    %908 = vmatpush2.bf16.msra.mxu0 %v706
    %909 = vmatprep.subr.bf16.mxu0 %v703
    %910 = vmatpush2.bf16.msra.mxu0 %v702
    %911 = vmatprep.subr.bf16.mxu0 %v699
    %912 = vmatpush2.bf16.msra.mxu0 %v698
    %913 = vmatprep.subr.bf16.mxu0 %v695
    %914 = vmatpush2.bf16.msra.mxu0 %v694
    %915 = vmatprep.subr.bf16.mxu0 %v691
    %916 = vmatpush2.bf16.msra.mxu0 %v690
    %917 = vmatprep.subr.bf16.mxu0 %v687
    %918 = vmatpush2.bf16.msra.mxu0 %v686
    %919 = vmatprep.mubr.bf16.mxu0 %v201
    %920 = vmatmul.mubr.bf16.gmra.mxu0 %v200
    %v921 = vpop.f32.mrf.mxu0
    %v922 = vadd.f32 %v881, %v921
    %v923 = vpop.f32.mrf.mxu0
    %v924 = vadd.f32 %v883, %v923
    %v925 = vpop.f32.mrf.mxu0
    %v926 = vpop.f32.mrf.mxu0
    %927 = vdwg.mxu0
    %928 = vmatprep.subr.bf16.mxu0 %v621
    %929 = vmatpush1.bf16.msra.mxu0 %v620
    %930 = vmatprep.subr.bf16.mxu0 %v617
    %931 = vmatpush1.bf16.msra.mxu0 %v616
    %932 = vmatprep.subr.bf16.mxu0 %v613
    %933 = vmatpush1.bf16.msra.mxu0 %v612
    %934 = vmatprep.subr.bf16.mxu0 %v609
    %935 = vmatpush1.bf16.msra.mxu0 %v608
    %936 = vmatprep.subr.bf16.mxu0 %v605
    %937 = vmatpush1.bf16.msra.mxu0 %v604
    %938 = vmatprep.subr.bf16.mxu0 %v601
    %939 = vmatpush1.bf16.msra.mxu0 %v600
    %940 = vmatprep.subr.bf16.mxu0 %v597
    %941 = vmatpush1.bf16.msra.mxu0 %v596
    %942 = vmatprep.subr.bf16.mxu0 %v593
    %943 = vmatpush1.bf16.msra.mxu0 %v592
    %944 = vmatprep.subr.bf16.mxu0 %v653
    %945 = vmatpush2.bf16.msra.mxu0 %v652
    %946 = vmatprep.subr.bf16.mxu0 %v649
    %947 = vmatpush2.bf16.msra.mxu0 %v648
    %948 = vmatprep.subr.bf16.mxu0 %v645
    %949 = vmatpush2.bf16.msra.mxu0 %v644
    %950 = vmatprep.subr.bf16.mxu0 %v641
    %951 = vmatpush2.bf16.msra.mxu0 %v640
    %952 = vmatprep.subr.bf16.mxu0 %v637
    %953 = vmatpush2.bf16.msra.mxu0 %v636
    %954 = vmatprep.subr.bf16.mxu0 %v633
    %955 = vmatpush2.bf16.msra.mxu0 %v632
    %956 = vmatprep.subr.bf16.mxu0 %v629
    %957 = vmatpush2.bf16.msra.mxu0 %v628
    %958 = vmatprep.subr.bf16.mxu0 %v625
    %959 = vmatpush2.bf16.msra.mxu0 %v624
    %960 = vmatprep.mubr.bf16.mxu0 %v199
    %961 = vmatmul.mubr.bf16.gmra.mxu0 %v198
    %v962 = vpop.f32.mrf.mxu0
    %v963 = vadd.f32 %v183, %v962
    %v964 = vpop.f32.mrf.mxu0
    %v965 = vadd.f32 %v187, %v964
    %v966 = vpop.f32.mrf.mxu0
    %v967 = vpop.f32.mrf.mxu0
    %968 = vdwg.mxu0
    %969 = vmatprep.subr.bf16.mxu0 %v685
    %970 = vmatpush1.bf16.msra.mxu0 %v684
    %971 = vmatprep.subr.bf16.mxu0 %v681
    %972 = vmatpush1.bf16.msra.mxu0 %v680
    %973 = vmatprep.subr.bf16.mxu0 %v677
    %974 = vmatpush1.bf16.msra.mxu0 %v676
    %975 = vmatprep.subr.bf16.mxu0 %v673
    %976 = vmatpush1.bf16.msra.mxu0 %v672
    %977 = vmatprep.subr.bf16.mxu0 %v669
    %978 = vmatpush1.bf16.msra.mxu0 %v668
    %979 = vmatprep.subr.bf16.mxu0 %v665
    %980 = vmatpush1.bf16.msra.mxu0 %v664
    %981 = vmatprep.subr.bf16.mxu0 %v661
    %982 = vmatpush1.bf16.msra.mxu0 %v660
    %983 = vmatprep.subr.bf16.mxu0 %v657
    %984 = vmatpush1.bf16.msra.mxu0 %v656
    %985 = vmatprep.subr.bf16.mxu0 %v717
    %986 = vmatpush2.bf16.msra.mxu0 %v716
    %987 = vmatprep.subr.bf16.mxu0 %v713
    %988 = vmatpush2.bf16.msra.mxu0 %v712
    %989 = vmatprep.subr.bf16.mxu0 %v709
    %990 = vmatpush2.bf16.msra.mxu0 %v708
    %991 = vmatprep.subr.bf16.mxu0 %v705
    %992 = vmatpush2.bf16.msra.mxu0 %v704
    %993 = vmatprep.subr.bf16.mxu0 %v701
    %994 = vmatpush2.bf16.msra.mxu0 %v700
    %995 = vmatprep.subr.bf16.mxu0 %v697
    %996 = vmatpush2.bf16.msra.mxu0 %v696
    %997 = vmatprep.subr.bf16.mxu0 %v693
    %998 = vmatpush2.bf16.msra.mxu0 %v692
    %999 = vmatprep.subr.bf16.mxu0 %v689
    %1000 = vmatpush2.bf16.msra.mxu0 %v688
    %1001 = vmatprep.mubr.bf16.mxu0 %v201
    %1002 = vmatmul.mubr.bf16.gmra.mxu0 %v200
    %v1003 = vpop.f32.mrf.mxu0
    %v1004 = vadd.f32 %v963, %v1003
    %v1005 = vpop.f32.mrf.mxu0
    %v1006 = vadd.f32 %v965, %v1005
    %v1007 = vpop.f32.mrf.mxu0
    %v1008 = vpop.f32.mrf.mxu0
    %1009 = vdwg.mxu0
    %v1010 = vmax.f32 %v922, 0.0
    %v1011 = vmax.f32 %v924, 0.0
    %v1012 = vmax.f32 %v1004, 0.0
    %v1013 = vmax.f32 %v1006, 0.0
    %v1014 = vpack.c.bf16 %v1010, %v1010
    %v1015 = vpack.c.bf16 %v1011, %v1011
    %v1016 = vpack.c.bf16 %v1012, %v1012
    %v1017 = vpack.c.bf16 %v1013, %v1013
    %v1022 = vunpack.c.l.b16 %v1014
    %v1023 = vunpack.c.l.b16 %v1015
    %v1024 = vunpack.c.l.b16 %v1016
    %v1025 = vunpack.c.l.b16 %v1017
    %v1026 = vpack.c.b16 %v1023, %v1022
    %v1027 = vpack.c.b16 %v1025, %v1024
    %1030 = vst [vmem:[%s3] sm:$0xff] %v1026
    %1031 = vst [vmem:[%s3 + $0x8] sm:$0xff] %v1027
    // Predicated region
    $region22: #{resnet_forward.2} parent=1 // pred_check
      _
    $region23: #{resnet_forward.2} parent=1 // pred_check_branch
      %1033 = sbr.rel (0) target = $region25
    $region24: #{resnet_forward.2} parent=1 // pred_region
      _
    $region25: #{resnet_forward.2} parent=1 // pred_fallthru
      _
    // Predicated region
    $region26: #{resnet_forward.2} parent=1 // pred_check
      _
    $region27: #{resnet_forward.2} parent=1 // pred_check_branch
      %1035 = sbr.rel (0) target = $region29
    $region28: #{resnet_forward.2} parent=1 // pred_region
      _
    $region29: #{resnet_forward.2} parent=1 // pred_fallthru
      _
    %1036 = vsyncpa [#allocation3], 1
    %1037 = vsyncpa [#allocation5], 1

// kernel: resnet_forward.3
$region0: #{resnet_forward.3}
  #allocation0 [shape = 'u32[]', space=smem, size = 0x4, offset = 0x4, fixed_abs, tag = 'smem constant byte address 0x4 - core index']
  #allocation1 [shape = 'u32[144,128]{1,0:T(1,128)}', space=vmem, size = 0x12000, scoped, tag = 'internal scratch']
  %s0 = inlined_call_operand.vmem [shape: bf16[8,512], index: 0, kind: input, shape index: {}]
  %s1 = inlined_call_operand.vmem [shape: bf16[512,512], index: 1, kind: input, shape index: {}]
  %s2 = inlined_call_operand.vmem [shape: f32[1,512], index: 2, kind: input, shape index: {}]
  %s3 = inlined_call_operand.vmem [shape: f32[8,512], index: 3, kind: input, shape index: {}]
  %s4 = inlined_call_operand.vmem [shape: f32[8,512], index: 4, kind: output, shape index: {}]
  %s5 = sld [smem:[#allocation0]]
  $region26: #{resnet_forward.3} parent=0
    _
  %s7 = ssub.s32 1, %s5
  %s8 = scalar_select 0, %s7, %s5
  // Predicated region
  $region2: #{resnet_forward.3} parent=0 // pred_check
    _
  $region3: #{resnet_forward.3} parent=0 // pred_check_branch
    %10 = sbr.rel (0) target = $region5
  $region4: #{resnet_forward.3} parent=0 // pred_region
    _
  $region5: #{resnet_forward.3} parent=0 // pred_fallthru
    _
  // Predicated region
  $region6: #{resnet_forward.3} parent=0 // pred_check
    _
  $region7: #{resnet_forward.3} parent=0 // pred_check_branch
    %12 = sbr.rel (0) target = $region9
  $region8: #{resnet_forward.3} parent=0 // pred_region
    _
  $region9: #{resnet_forward.3} parent=0 // pred_fallthru
    _
  // Predicated region
  $region10: #{resnet_forward.3} parent=0 // pred_check
    _
  $region11: #{resnet_forward.3} parent=0 // pred_check_branch
    %14 = sbr.rel (0) target = $region13
  $region12: #{resnet_forward.3} parent=0 // pred_region
    _
  $region13: #{resnet_forward.3} parent=0 // pred_fallthru
    _
  // Predicated region
  $region14: #{resnet_forward.3} parent=0 // pred_check
    _
  $region15: #{resnet_forward.3} parent=0 // pred_check_branch
    %16 = sbr.rel (0) target = $region17
  $region16: #{resnet_forward.3} parent=0 // pred_region
    _
  $region17: #{resnet_forward.3} parent=0 // pred_fallthru
    _
  %v17 = vld [vmem:[%s0] sm:$0xff]
  %v18 = vld [vmem:[%s0 + $0x8] sm:$0xff]
  %v19 = vld [vmem:[%s1] sm:$0xff]
  %v20 = vld [vmem:[%s1 + $0x8] sm:$0xff]
  %v21 = vld [vmem:[%s1 + $0x10] sm:$0xff]
  %v22 = vld [vmem:[%s1 + $0x18] sm:$0xff]
  %v23 = vld [vmem:[%s1 + $0x20] sm:$0xff]
  %v24 = vld [vmem:[%s1 + $0x28] sm:$0xff]
  %v25 = vld [vmem:[%s1 + $0x30] sm:$0xff]
  %v26 = vld [vmem:[%s1 + $0x38] sm:$0xff]
  %v27 = vld [vmem:[%s1 + $0x40] sm:$0xff]
  %v28 = vld [vmem:[%s1 + $0x48] sm:$0xff]
  %v29 = vld [vmem:[%s1 + $0x50] sm:$0xff]
  %v30 = vld [vmem:[%s1 + $0x58] sm:$0xff]
  %v31 = vld [vmem:[%s1 + $0x60] sm:$0xff]
  %v32 = vld [vmem:[%s1 + $0x68] sm:$0xff]
  %v33 = vld [vmem:[%s1 + $0x70] sm:$0xff]
  %v34 = vld [vmem:[%s1 + $0x78] sm:$0xff]
  %v35 = vld [vmem:[%s1 + $0x80] sm:$0xff]
  %v36 = vld [vmem:[%s1 + $0x88] sm:$0xff]
  %v37 = vld [vmem:[%s1 + $0x90] sm:$0xff]
  %v38 = vld [vmem:[%s1 + $0x98] sm:$0xff]
  %v39 = vld [vmem:[%s1 + $0xa0] sm:$0xff]
  %v40 = vld [vmem:[%s1 + $0xa8] sm:$0xff]
  %v41 = vld [vmem:[%s1 + $0xb0] sm:$0xff]
  %v42 = vld [vmem:[%s1 + $0xb8] sm:$0xff]
  %v43 = vld [vmem:[%s1 + $0xc0] sm:$0xff]
  %v44 = vld [vmem:[%s1 + $0xc8] sm:$0xff]
  %v45 = vld [vmem:[%s1 + $0xd0] sm:$0xff]
  %v46 = vld [vmem:[%s1 + $0xd8] sm:$0xff]
  %v47 = vld [vmem:[%s1 + $0xe0] sm:$0xff]
  %v48 = vld [vmem:[%s1 + $0xe8] sm:$0xff]
  %v49 = vld [vmem:[%s1 + $0xf0] sm:$0xff]
  %v50 = vld [vmem:[%s1 + $0xf8] sm:$0xff]
  %v51 = vld [vmem:[%s1 + $0x100] sm:$0xff]
  %v52 = vld [vmem:[%s1 + $0x108] sm:$0xff]
  %v53 = vld [vmem:[%s1 + $0x110] sm:$0xff]
  %v54 = vld [vmem:[%s1 + $0x118] sm:$0xff]
  %v55 = vld [vmem:[%s1 + $0x120] sm:$0xff]
  %v56 = vld [vmem:[%s1 + $0x128] sm:$0xff]
  %v57 = vld [vmem:[%s1 + $0x130] sm:$0xff]
  %v58 = vld [vmem:[%s1 + $0x138] sm:$0xff]
  %v59 = vld [vmem:[%s1 + $0x140] sm:$0xff]
  %v60 = vld [vmem:[%s1 + $0x148] sm:$0xff]
  %v61 = vld [vmem:[%s1 + $0x150] sm:$0xff]
  %v62 = vld [vmem:[%s1 + $0x158] sm:$0xff]
  %v63 = vld [vmem:[%s1 + $0x160] sm:$0xff]
  %v64 = vld [vmem:[%s1 + $0x168] sm:$0xff]
  %v65 = vld [vmem:[%s1 + $0x170] sm:$0xff]
  %v66 = vld [vmem:[%s1 + $0x178] sm:$0xff]
  %v67 = vld [vmem:[%s1 + $0x180] sm:$0xff]
  %v68 = vld [vmem:[%s1 + $0x188] sm:$0xff]
  %v69 = vld [vmem:[%s1 + $0x190] sm:$0xff]
  %v70 = vld [vmem:[%s1 + $0x198] sm:$0xff]
  %v71 = vld [vmem:[%s1 + $0x1a0] sm:$0xff]
  %v72 = vld [vmem:[%s1 + $0x1a8] sm:$0xff]
  %v73 = vld [vmem:[%s1 + $0x1b0] sm:$0xff]
  %v74 = vld [vmem:[%s1 + $0x1b8] sm:$0xff]
  %v75 = vld [vmem:[%s1 + $0x1c0] sm:$0xff]
  %v76 = vld [vmem:[%s1 + $0x1c8] sm:$0xff]
  %v77 = vld [vmem:[%s1 + $0x1d0] sm:$0xff]
  %v78 = vld [vmem:[%s1 + $0x1d8] sm:$0xff]
  %v79 = vld [vmem:[%s1 + $0x1e0] sm:$0xff]
  %v80 = vld [vmem:[%s1 + $0x1e8] sm:$0xff]
  %v81 = vld [vmem:[%s1 + $0x1f0] sm:$0xff]
  %v82 = vld [vmem:[%s1 + $0x1f8] sm:$0xff]
  %v83 = vld [vmem:[%s1 + $0x200] sm:$0xff]
  %v84 = vld [vmem:[%s1 + $0x208] sm:$0xff]
  %v85 = vld [vmem:[%s1 + $0x210] sm:$0xff]
  %v86 = vld [vmem:[%s1 + $0x218] sm:$0xff]
  %v87 = vld [vmem:[%s1 + $0x220] sm:$0xff]
  %v88 = vld [vmem:[%s1 + $0x228] sm:$0xff]
  %v89 = vld [vmem:[%s1 + $0x230] sm:$0xff]
  %v90 = vld [vmem:[%s1 + $0x238] sm:$0xff]
  %v91 = vld [vmem:[%s1 + $0x240] sm:$0xff]
  %v92 = vld [vmem:[%s1 + $0x248] sm:$0xff]
  %v93 = vld [vmem:[%s1 + $0x250] sm:$0xff]
  %v94 = vld [vmem:[%s1 + $0x258] sm:$0xff]
  %v95 = vld [vmem:[%s1 + $0x260] sm:$0xff]
  %v96 = vld [vmem:[%s1 + $0x268] sm:$0xff]
  %v97 = vld [vmem:[%s1 + $0x270] sm:$0xff]
  %v98 = vld [vmem:[%s1 + $0x278] sm:$0xff]
  %v99 = vld [vmem:[%s1 + $0x280] sm:$0xff]
  %v100 = vld [vmem:[%s1 + $0x288] sm:$0xff]
  %v101 = vld [vmem:[%s1 + $0x290] sm:$0xff]
  %v102 = vld [vmem:[%s1 + $0x298] sm:$0xff]
  %v103 = vld [vmem:[%s1 + $0x2a0] sm:$0xff]
  %v104 = vld [vmem:[%s1 + $0x2a8] sm:$0xff]
  %v105 = vld [vmem:[%s1 + $0x2b0] sm:$0xff]
  %v106 = vld [vmem:[%s1 + $0x2b8] sm:$0xff]
  %v107 = vld [vmem:[%s1 + $0x2c0] sm:$0xff]
  %v108 = vld [vmem:[%s1 + $0x2c8] sm:$0xff]
  %v109 = vld [vmem:[%s1 + $0x2d0] sm:$0xff]
  %v110 = vld [vmem:[%s1 + $0x2d8] sm:$0xff]
  %v111 = vld [vmem:[%s1 + $0x2e0] sm:$0xff]
  %v112 = vld [vmem:[%s1 + $0x2e8] sm:$0xff]
  %v113 = vld [vmem:[%s1 + $0x2f0] sm:$0xff]
  %v114 = vld [vmem:[%s1 + $0x2f8] sm:$0xff]
  %v115 = vld [vmem:[%s1 + $0x300] sm:$0xff]
  %v116 = vld [vmem:[%s1 + $0x308] sm:$0xff]
  %v117 = vld [vmem:[%s1 + $0x310] sm:$0xff]
  %v118 = vld [vmem:[%s1 + $0x318] sm:$0xff]
  %v119 = vld [vmem:[%s1 + $0x320] sm:$0xff]
  %v120 = vld [vmem:[%s1 + $0x328] sm:$0xff]
  %v121 = vld [vmem:[%s1 + $0x330] sm:$0xff]
  %v122 = vld [vmem:[%s1 + $0x338] sm:$0xff]
  %v123 = vld [vmem:[%s1 + $0x340] sm:$0xff]
  %v124 = vld [vmem:[%s1 + $0x348] sm:$0xff]
  %v125 = vld [vmem:[%s1 + $0x350] sm:$0xff]
  %v126 = vld [vmem:[%s1 + $0x358] sm:$0xff]
  %v127 = vld [vmem:[%s1 + $0x360] sm:$0xff]
  %v128 = vld [vmem:[%s1 + $0x368] sm:$0xff]
  %v129 = vld [vmem:[%s1 + $0x370] sm:$0xff]
  %v130 = vld [vmem:[%s1 + $0x378] sm:$0xff]
  %v131 = vld [vmem:[%s1 + $0x380] sm:$0xff]
  %v132 = vld [vmem:[%s1 + $0x388] sm:$0xff]
  %v133 = vld [vmem:[%s1 + $0x390] sm:$0xff]
  %v134 = vld [vmem:[%s1 + $0x398] sm:$0xff]
  %v135 = vld [vmem:[%s1 + $0x3a0] sm:$0xff]
  %v136 = vld [vmem:[%s1 + $0x3a8] sm:$0xff]
  %v137 = vld [vmem:[%s1 + $0x3b0] sm:$0xff]
  %v138 = vld [vmem:[%s1 + $0x3b8] sm:$0xff]
  %v139 = vld [vmem:[%s1 + $0x3c0] sm:$0xff]
  %v140 = vld [vmem:[%s1 + $0x3c8] sm:$0xff]
  %v141 = vld [vmem:[%s1 + $0x3d0] sm:$0xff]
  %v142 = vld [vmem:[%s1 + $0x3d8] sm:$0xff]
  %v143 = vld [vmem:[%s1 + $0x3e0] sm:$0xff]
  %v144 = vld [vmem:[%s1 + $0x3e8] sm:$0xff]
  %v145 = vld [vmem:[%s1 + $0x3f0] sm:$0xff]
  %v146 = vld [vmem:[%s1 + $0x3f8] sm:$0xff]
  %v147 = vld [vmem:[%s2] sm:$0xf]
  %v149 = vlaneseq
  %v150 = vshrl.u32 %v149, 7
  %v151 = vsub.s32 0, %v150
  %v152 = vrot.slane %v147, %v151
  %v153 = vlaneseq
  %v154 = vshrl.u32 %v153, 7
  %v155 = vsub.s32 1, %v154
  %v156 = vrot.slane %v147, %v155
  %v157 = vlaneseq
  %v158 = vshrl.u32 %v157, 7
  %v159 = vsub.s32 2, %v158
  %v160 = vrot.slane %v147, %v159
  %v161 = vlaneseq
  %v162 = vshrl.u32 %v161, 7
  %v163 = vsub.s32 3, %v162
  %v164 = vrot.slane %v147, %v163
  %v171 = vunpack.c.l.b16 %v17
  %v172 = vunpack.c.h.b16 %v17
  %v173 = vunpack.c.l.b16 %v18
  %v174 = vunpack.c.h.b16 %v18
  %v175 = vpack.c.b16 %v171, %v171
  %v176 = vpack.c.b16 %v172, %v172
  %v177 = vpack.c.b16 %v173, %v173
  %v178 = vpack.c.b16 %v174, %v174
  %v311 = vunpack.c.l.b16 %v19
  %v312 = vunpack.c.h.b16 %v19
  %v313 = vunpack.c.l.b16 %v20
  %v314 = vunpack.c.h.b16 %v20
  %v315 = vunpack.c.l.b16 %v21
  %v316 = vunpack.c.h.b16 %v21
  %v317 = vunpack.c.l.b16 %v22
  %v318 = vunpack.c.h.b16 %v22
  %v319 = vunpack.c.l.b16 %v23
  %v320 = vunpack.c.h.b16 %v23
  %v321 = vunpack.c.l.b16 %v24
  %v322 = vunpack.c.h.b16 %v24
  %v323 = vunpack.c.l.b16 %v25
  %v324 = vunpack.c.h.b16 %v25
  %v325 = vunpack.c.l.b16 %v26
  %v326 = vunpack.c.h.b16 %v26
  %v327 = vunpack.c.l.b16 %v27
  %v328 = vunpack.c.h.b16 %v27
  %v329 = vunpack.c.l.b16 %v28
  %v330 = vunpack.c.h.b16 %v28
  %v331 = vunpack.c.l.b16 %v29
  %v332 = vunpack.c.h.b16 %v29
  %v333 = vunpack.c.l.b16 %v30
  %v334 = vunpack.c.h.b16 %v30
  %v335 = vunpack.c.l.b16 %v31
  %v336 = vunpack.c.h.b16 %v31
  %v337 = vunpack.c.l.b16 %v32
  %v338 = vunpack.c.h.b16 %v32
  %v339 = vunpack.c.l.b16 %v33
  %v340 = vunpack.c.h.b16 %v33
  %v341 = vunpack.c.l.b16 %v34
  %v342 = vunpack.c.h.b16 %v34
  %v343 = vunpack.c.l.b16 %v35
  %v344 = vunpack.c.h.b16 %v35
  %v345 = vunpack.c.l.b16 %v36
  %v346 = vunpack.c.h.b16 %v36
  %v347 = vunpack.c.l.b16 %v37
  %v348 = vunpack.c.h.b16 %v37
  %v349 = vunpack.c.l.b16 %v38
  %v350 = vunpack.c.h.b16 %v38
  %v351 = vunpack.c.l.b16 %v39
  %v352 = vunpack.c.h.b16 %v39
  %v353 = vunpack.c.l.b16 %v40
  %v354 = vunpack.c.h.b16 %v40
  %v355 = vunpack.c.l.b16 %v41
  %v356 = vunpack.c.h.b16 %v41
  %v357 = vunpack.c.l.b16 %v42
  %v358 = vunpack.c.h.b16 %v42
  %v359 = vunpack.c.l.b16 %v43
  %v360 = vunpack.c.h.b16 %v43
  %v361 = vunpack.c.l.b16 %v44
  %v362 = vunpack.c.h.b16 %v44
  %v363 = vunpack.c.l.b16 %v45
  %v364 = vunpack.c.h.b16 %v45
  %v365 = vunpack.c.l.b16 %v46
  %v366 = vunpack.c.h.b16 %v46
  %v367 = vunpack.c.l.b16 %v47
  %v368 = vunpack.c.h.b16 %v47
  %v369 = vunpack.c.l.b16 %v48
  %v370 = vunpack.c.h.b16 %v48
  %v371 = vunpack.c.l.b16 %v49
  %v372 = vunpack.c.h.b16 %v49
  %v373 = vunpack.c.l.b16 %v50
  %v374 = vunpack.c.h.b16 %v50
  %v375 = vunpack.c.l.b16 %v51
  %v376 = vunpack.c.h.b16 %v51
  %v377 = vunpack.c.l.b16 %v52
  %v378 = vunpack.c.h.b16 %v52
  %v379 = vunpack.c.l.b16 %v53
  %v380 = vunpack.c.h.b16 %v53
  %v381 = vunpack.c.l.b16 %v54
  %v382 = vunpack.c.h.b16 %v54
  %v383 = vunpack.c.l.b16 %v55
  %v384 = vunpack.c.h.b16 %v55
  %v385 = vunpack.c.l.b16 %v56
  %v386 = vunpack.c.h.b16 %v56
  %v387 = vunpack.c.l.b16 %v57
  %v388 = vunpack.c.h.b16 %v57
  %v389 = vunpack.c.l.b16 %v58
  %v390 = vunpack.c.h.b16 %v58
  %v391 = vunpack.c.l.b16 %v59
  %v392 = vunpack.c.h.b16 %v59
  %v393 = vunpack.c.l.b16 %v60
  %v394 = vunpack.c.h.b16 %v60
  %v395 = vunpack.c.l.b16 %v61
  %v396 = vunpack.c.h.b16 %v61
  %v397 = vunpack.c.l.b16 %v62
  %v398 = vunpack.c.h.b16 %v62
  %v399 = vunpack.c.l.b16 %v63
  %v400 = vunpack.c.h.b16 %v63
  %v401 = vunpack.c.l.b16 %v64
  %v402 = vunpack.c.h.b16 %v64
  %v403 = vunpack.c.l.b16 %v65
  %v404 = vunpack.c.h.b16 %v65
  %v405 = vunpack.c.l.b16 %v66
  %v406 = vunpack.c.h.b16 %v66
  %v407 = vunpack.c.l.b16 %v67
  %v408 = vunpack.c.h.b16 %v67
  %v409 = vunpack.c.l.b16 %v68
  %v410 = vunpack.c.h.b16 %v68
  %v411 = vunpack.c.l.b16 %v69
  %v412 = vunpack.c.h.b16 %v69
  %v413 = vunpack.c.l.b16 %v70
  %v414 = vunpack.c.h.b16 %v70
  %v415 = vunpack.c.l.b16 %v71
  %v416 = vunpack.c.h.b16 %v71
  %v417 = vunpack.c.l.b16 %v72
  %v418 = vunpack.c.h.b16 %v72
  %v419 = vunpack.c.l.b16 %v73
  %v420 = vunpack.c.h.b16 %v73
  %v421 = vunpack.c.l.b16 %v74
  %v422 = vunpack.c.h.b16 %v74
  %v423 = vunpack.c.l.b16 %v75
  %v424 = vunpack.c.h.b16 %v75
  %v425 = vunpack.c.l.b16 %v76
  %v426 = vunpack.c.h.b16 %v76
  %v427 = vunpack.c.l.b16 %v77
  %v428 = vunpack.c.h.b16 %v77
  %v429 = vunpack.c.l.b16 %v78
  %v430 = vunpack.c.h.b16 %v78
  %v431 = vunpack.c.l.b16 %v79
  %v432 = vunpack.c.h.b16 %v79
  %v433 = vunpack.c.l.b16 %v80
  %v434 = vunpack.c.h.b16 %v80
  %v435 = vunpack.c.l.b16 %v81
  %v436 = vunpack.c.h.b16 %v81
  %v437 = vunpack.c.l.b16 %v82
  %v438 = vunpack.c.h.b16 %v82
  %v439 = vunpack.c.l.b16 %v83
  %v440 = vunpack.c.h.b16 %v83
  %v441 = vunpack.c.l.b16 %v84
  %v442 = vunpack.c.h.b16 %v84
  %v443 = vunpack.c.l.b16 %v85
  %v444 = vunpack.c.h.b16 %v85
  %v445 = vunpack.c.l.b16 %v86
  %v446 = vunpack.c.h.b16 %v86
  %v447 = vunpack.c.l.b16 %v87
  %v448 = vunpack.c.h.b16 %v87
  %v449 = vunpack.c.l.b16 %v88
  %v450 = vunpack.c.h.b16 %v88
  %v451 = vunpack.c.l.b16 %v89
  %v452 = vunpack.c.h.b16 %v89
  %v453 = vunpack.c.l.b16 %v90
  %v454 = vunpack.c.h.b16 %v90
  %v455 = vunpack.c.l.b16 %v91
  %v456 = vunpack.c.h.b16 %v91
  %v457 = vunpack.c.l.b16 %v92
  %v458 = vunpack.c.h.b16 %v92
  %v459 = vunpack.c.l.b16 %v93
  %v460 = vunpack.c.h.b16 %v93
  %v461 = vunpack.c.l.b16 %v94
  %v462 = vunpack.c.h.b16 %v94
  %v463 = vunpack.c.l.b16 %v95
  %v464 = vunpack.c.h.b16 %v95
  %v465 = vunpack.c.l.b16 %v96
  %v466 = vunpack.c.h.b16 %v96
  %v467 = vunpack.c.l.b16 %v97
  %v468 = vunpack.c.h.b16 %v97
  %v469 = vunpack.c.l.b16 %v98
  %v470 = vunpack.c.h.b16 %v98
  %v471 = vunpack.c.l.b16 %v99
  %v472 = vunpack.c.h.b16 %v99
  %v473 = vunpack.c.l.b16 %v100
  %v474 = vunpack.c.h.b16 %v100
  %v475 = vunpack.c.l.b16 %v101
  %v476 = vunpack.c.h.b16 %v101
  %v477 = vunpack.c.l.b16 %v102
  %v478 = vunpack.c.h.b16 %v102
  %v479 = vunpack.c.l.b16 %v103
  %v480 = vunpack.c.h.b16 %v103
  %v481 = vunpack.c.l.b16 %v104
  %v482 = vunpack.c.h.b16 %v104
  %v483 = vunpack.c.l.b16 %v105
  %v484 = vunpack.c.h.b16 %v105
  %v485 = vunpack.c.l.b16 %v106
  %v486 = vunpack.c.h.b16 %v106
  %v487 = vunpack.c.l.b16 %v107
  %v488 = vunpack.c.h.b16 %v107
  %v489 = vunpack.c.l.b16 %v108
  %v490 = vunpack.c.h.b16 %v108
  %v491 = vunpack.c.l.b16 %v109
  %v492 = vunpack.c.h.b16 %v109
  %v493 = vunpack.c.l.b16 %v110
  %v494 = vunpack.c.h.b16 %v110
  %v495 = vunpack.c.l.b16 %v111
  %v496 = vunpack.c.h.b16 %v111
  %v497 = vunpack.c.l.b16 %v112
  %v498 = vunpack.c.h.b16 %v112
  %v499 = vunpack.c.l.b16 %v113
  %v500 = vunpack.c.h.b16 %v113
  %v501 = vunpack.c.l.b16 %v114
  %v502 = vunpack.c.h.b16 %v114
  %v503 = vunpack.c.l.b16 %v115
  %v504 = vunpack.c.h.b16 %v115
  %v505 = vunpack.c.l.b16 %v116
  %v506 = vunpack.c.h.b16 %v116
  %v507 = vunpack.c.l.b16 %v117
  %v508 = vunpack.c.h.b16 %v117
  %v509 = vunpack.c.l.b16 %v118
  %v510 = vunpack.c.h.b16 %v118
  %v511 = vunpack.c.l.b16 %v119
  %v512 = vunpack.c.h.b16 %v119
  %v513 = vunpack.c.l.b16 %v120
  %v514 = vunpack.c.h.b16 %v120
  %v515 = vunpack.c.l.b16 %v121
  %v516 = vunpack.c.h.b16 %v121
  %v517 = vunpack.c.l.b16 %v122
  %v518 = vunpack.c.h.b16 %v122
  %v519 = vunpack.c.l.b16 %v123
  %v520 = vunpack.c.h.b16 %v123
  %v521 = vunpack.c.l.b16 %v124
  %v522 = vunpack.c.h.b16 %v124
  %v523 = vunpack.c.l.b16 %v125
  %v524 = vunpack.c.h.b16 %v125
  %v525 = vunpack.c.l.b16 %v126
  %v526 = vunpack.c.h.b16 %v126
  %v527 = vunpack.c.l.b16 %v127
  %v528 = vunpack.c.h.b16 %v127
  %v529 = vunpack.c.l.b16 %v128
  %v530 = vunpack.c.h.b16 %v128
  %v531 = vunpack.c.l.b16 %v129
  %v532 = vunpack.c.h.b16 %v129
  %v533 = vunpack.c.l.b16 %v130
  %v534 = vunpack.c.h.b16 %v130
  %v535 = vunpack.c.l.b16 %v131
  %v536 = vunpack.c.h.b16 %v131
  %v537 = vunpack.c.l.b16 %v132
  %v538 = vunpack.c.h.b16 %v132
  %v539 = vunpack.c.l.b16 %v133
  %v540 = vunpack.c.h.b16 %v133
  %v541 = vunpack.c.l.b16 %v134
  %v542 = vunpack.c.h.b16 %v134
  %v543 = vunpack.c.l.b16 %v135
  %v544 = vunpack.c.h.b16 %v135
  %v545 = vunpack.c.l.b16 %v136
  %v546 = vunpack.c.h.b16 %v136
  %v547 = vunpack.c.l.b16 %v137
  %v548 = vunpack.c.h.b16 %v137
  %v549 = vunpack.c.l.b16 %v138
  %v550 = vunpack.c.h.b16 %v138
  %v551 = vunpack.c.l.b16 %v139
  %v552 = vunpack.c.h.b16 %v139
  %v553 = vunpack.c.l.b16 %v140
  %v554 = vunpack.c.h.b16 %v140
  %v555 = vunpack.c.l.b16 %v141
  %v556 = vunpack.c.h.b16 %v141
  %v557 = vunpack.c.l.b16 %v142
  %v558 = vunpack.c.h.b16 %v142
  %v559 = vunpack.c.l.b16 %v143
  %v560 = vunpack.c.h.b16 %v143
  %v561 = vunpack.c.l.b16 %v144
  %v562 = vunpack.c.h.b16 %v144
  %v563 = vunpack.c.l.b16 %v145
  %v564 = vunpack.c.h.b16 %v145
  %v565 = vunpack.c.l.b16 %v146
  %v566 = vunpack.c.h.b16 %v146
  %v567 = vpack.c.b16 %v315, %v311
  %v568 = vpack.c.b16 %v316, %v312
  %v569 = vpack.c.b16 %v317, %v313
  %v570 = vpack.c.b16 %v318, %v314
  %v571 = vpack.c.b16 %v323, %v319
  %v572 = vpack.c.b16 %v324, %v320
  %v573 = vpack.c.b16 %v325, %v321
  %v574 = vpack.c.b16 %v326, %v322
  %v575 = vpack.c.b16 %v331, %v327
  %v576 = vpack.c.b16 %v332, %v328
  %v577 = vpack.c.b16 %v333, %v329
  %v578 = vpack.c.b16 %v334, %v330
  %v579 = vpack.c.b16 %v339, %v335
  %v580 = vpack.c.b16 %v340, %v336
  %v581 = vpack.c.b16 %v341, %v337
  %v582 = vpack.c.b16 %v342, %v338
  %v583 = vpack.c.b16 %v347, %v343
  %v584 = vpack.c.b16 %v348, %v344
  %v585 = vpack.c.b16 %v349, %v345
  %v586 = vpack.c.b16 %v350, %v346
  %v587 = vpack.c.b16 %v355, %v351
  %v588 = vpack.c.b16 %v356, %v352
  %v589 = vpack.c.b16 %v357, %v353
  %v590 = vpack.c.b16 %v358, %v354
  %v591 = vpack.c.b16 %v363, %v359
  %v592 = vpack.c.b16 %v364, %v360
  %v593 = vpack.c.b16 %v365, %v361
  %v594 = vpack.c.b16 %v366, %v362
  %v595 = vpack.c.b16 %v371, %v367
  %v596 = vpack.c.b16 %v372, %v368
  %v597 = vpack.c.b16 %v373, %v369
  %v598 = vpack.c.b16 %v374, %v370
  %v599 = vpack.c.b16 %v379, %v375
  %v600 = vpack.c.b16 %v380, %v376
  %v601 = vpack.c.b16 %v381, %v377
  %v602 = vpack.c.b16 %v382, %v378
  %v603 = vpack.c.b16 %v387, %v383
  %v604 = vpack.c.b16 %v388, %v384
  %v605 = vpack.c.b16 %v389, %v385
  %v606 = vpack.c.b16 %v390, %v386
  %v607 = vpack.c.b16 %v395, %v391
  %v608 = vpack.c.b16 %v396, %v392
  %v609 = vpack.c.b16 %v397, %v393
  %v610 = vpack.c.b16 %v398, %v394
  %v611 = vpack.c.b16 %v403, %v399
  %v612 = vpack.c.b16 %v404, %v400
  %v613 = vpack.c.b16 %v405, %v401
  %v614 = vpack.c.b16 %v406, %v402
  %v615 = vpack.c.b16 %v411, %v407
  %v616 = vpack.c.b16 %v412, %v408
  %v617 = vpack.c.b16 %v413, %v409
  %v618 = vpack.c.b16 %v414, %v410
  %v619 = vpack.c.b16 %v419, %v415
  %v620 = vpack.c.b16 %v420, %v416
  %v621 = vpack.c.b16 %v421, %v417
  %v622 = vpack.c.b16 %v422, %v418
  %v623 = vpack.c.b16 %v427, %v423
  %v624 = vpack.c.b16 %v428, %v424
  %v625 = vpack.c.b16 %v429, %v425
  %v626 = vpack.c.b16 %v430, %v426
  %v627 = vpack.c.b16 %v435, %v431
  %v628 = vpack.c.b16 %v436, %v432
  %v629 = vpack.c.b16 %v437, %v433
  %v630 = vpack.c.b16 %v438, %v434
  %v631 = vpack.c.b16 %v443, %v439
  %v632 = vpack.c.b16 %v444, %v440
  %v633 = vpack.c.b16 %v445, %v441
  %v634 = vpack.c.b16 %v446, %v442
  %v635 = vpack.c.b16 %v451, %v447
  %v636 = vpack.c.b16 %v452, %v448
  %v637 = vpack.c.b16 %v453, %v449
  %v638 = vpack.c.b16 %v454, %v450
  %v639 = vpack.c.b16 %v459, %v455
  %v640 = vpack.c.b16 %v460, %v456
  %v641 = vpack.c.b16 %v461, %v457
  %v642 = vpack.c.b16 %v462, %v458
  %v643 = vpack.c.b16 %v467, %v463
  %v644 = vpack.c.b16 %v468, %v464
  %v645 = vpack.c.b16 %v469, %v465
  %v646 = vpack.c.b16 %v470, %v466
  %v647 = vpack.c.b16 %v475, %v471
  %v648 = vpack.c.b16 %v476, %v472
  %v649 = vpack.c.b16 %v477, %v473
  %v650 = vpack.c.b16 %v478, %v474
  %v651 = vpack.c.b16 %v483, %v479
  %v652 = vpack.c.b16 %v484, %v480
  %v653 = vpack.c.b16 %v485, %v481
  %v654 = vpack.c.b16 %v486, %v482
  %v655 = vpack.c.b16 %v491, %v487
  %v656 = vpack.c.b16 %v492, %v488
  %v657 = vpack.c.b16 %v493, %v489
  %v658 = vpack.c.b16 %v494, %v490
  %v659 = vpack.c.b16 %v499, %v495
  %v660 = vpack.c.b16 %v500, %v496
  %v661 = vpack.c.b16 %v501, %v497
  %v662 = vpack.c.b16 %v502, %v498
  %v663 = vpack.c.b16 %v507, %v503
  %v664 = vpack.c.b16 %v508, %v504
  %v665 = vpack.c.b16 %v509, %v505
  %v666 = vpack.c.b16 %v510, %v506
  %v667 = vpack.c.b16 %v515, %v511
  %v668 = vpack.c.b16 %v516, %v512
  %v669 = vpack.c.b16 %v517, %v513
  %v670 = vpack.c.b16 %v518, %v514
  %v671 = vpack.c.b16 %v523, %v519
  %v672 = vpack.c.b16 %v524, %v520
  %v673 = vpack.c.b16 %v525, %v521
  %v674 = vpack.c.b16 %v526, %v522
  %v675 = vpack.c.b16 %v531, %v527
  %v676 = vpack.c.b16 %v532, %v528
  %v677 = vpack.c.b16 %v533, %v529
  %v678 = vpack.c.b16 %v534, %v530
  %v679 = vpack.c.b16 %v539, %v535
  %v680 = vpack.c.b16 %v540, %v536
  %v681 = vpack.c.b16 %v541, %v537
  %v682 = vpack.c.b16 %v542, %v538
  %v683 = vpack.c.b16 %v547, %v543
  %v684 = vpack.c.b16 %v548, %v544
  %v685 = vpack.c.b16 %v549, %v545
  %v686 = vpack.c.b16 %v550, %v546
  %v687 = vpack.c.b16 %v555, %v551
  %v688 = vpack.c.b16 %v556, %v552
  %v689 = vpack.c.b16 %v557, %v553
  %v690 = vpack.c.b16 %v558, %v554
  %v691 = vpack.c.b16 %v563, %v559
  %v692 = vpack.c.b16 %v564, %v560
  %v693 = vpack.c.b16 %v565, %v561
  %v694 = vpack.c.b16 %v566, %v562
  %823 = vmatprep.subr.bf16.mxu0 %v596
  %824 = vmatpush1.bf16.msra.mxu0 %v595
  %825 = vmatprep.subr.bf16.mxu0 %v592
  %826 = vmatpush1.bf16.msra.mxu0 %v591
  %827 = vmatprep.subr.bf16.mxu0 %v588
  %828 = vmatpush1.bf16.msra.mxu0 %v587
  %829 = vmatprep.subr.bf16.mxu0 %v584
  %830 = vmatpush1.bf16.msra.mxu0 %v583
  %831 = vmatprep.subr.bf16.mxu0 %v580
  %832 = vmatpush1.bf16.msra.mxu0 %v579
  %833 = vmatprep.subr.bf16.mxu0 %v576
  %834 = vmatpush1.bf16.msra.mxu0 %v575
  %835 = vmatprep.subr.bf16.mxu0 %v572
  %836 = vmatpush1.bf16.msra.mxu0 %v571
  %837 = vmatprep.subr.bf16.mxu0 %v568
  %838 = vmatpush1.bf16.msra.mxu0 %v567
  %839 = vmatprep.subr.bf16.mxu0 %v628
  %840 = vmatpush2.bf16.msra.mxu0 %v627
  %841 = vmatprep.subr.bf16.mxu0 %v624
  %842 = vmatpush2.bf16.msra.mxu0 %v623
  %843 = vmatprep.subr.bf16.mxu0 %v620
  %844 = vmatpush2.bf16.msra.mxu0 %v619
  %845 = vmatprep.subr.bf16.mxu0 %v616
  %846 = vmatpush2.bf16.msra.mxu0 %v615
  %847 = vmatprep.subr.bf16.mxu0 %v612
  %848 = vmatpush2.bf16.msra.mxu0 %v611
  %849 = vmatprep.subr.bf16.mxu0 %v608
  %850 = vmatpush2.bf16.msra.mxu0 %v607
  %851 = vmatprep.subr.bf16.mxu0 %v604
  %852 = vmatpush2.bf16.msra.mxu0 %v603
  %853 = vmatprep.subr.bf16.mxu0 %v600
  %854 = vmatpush2.bf16.msra.mxu0 %v599
  %855 = vmatprep.mubr.bf16.mxu0 %v176
  %856 = vmatmul.mubr.bf16.gmra.mxu0 %v175
  %v857 = vpop.f32.mrf.mxu0
  %v858 = vadd.f32 %v152, %v857
  %v859 = vpop.f32.mrf.mxu0
  %v860 = vadd.f32 %v156, %v859
  %v861 = vpop.f32.mrf.mxu0
  %v862 = vpop.f32.mrf.mxu0
  %863 = vdwg.mxu0
  %864 = vmatprep.subr.bf16.mxu0 %v660
  %865 = vmatpush1.bf16.msra.mxu0 %v659
  %866 = vmatprep.subr.bf16.mxu0 %v656
  %867 = vmatpush1.bf16.msra.mxu0 %v655
  %868 = vmatprep.subr.bf16.mxu0 %v652
  %869 = vmatpush1.bf16.msra.mxu0 %v651
  %870 = vmatprep.subr.bf16.mxu0 %v648
  %871 = vmatpush1.bf16.msra.mxu0 %v647
  %872 = vmatprep.subr.bf16.mxu0 %v644
  %873 = vmatpush1.bf16.msra.mxu0 %v643
  %874 = vmatprep.subr.bf16.mxu0 %v640
  %875 = vmatpush1.bf16.msra.mxu0 %v639
  %876 = vmatprep.subr.bf16.mxu0 %v636
  %877 = vmatpush1.bf16.msra.mxu0 %v635
  %878 = vmatprep.subr.bf16.mxu0 %v632
  %879 = vmatpush1.bf16.msra.mxu0 %v631
  %880 = vmatprep.subr.bf16.mxu0 %v692
  %881 = vmatpush2.bf16.msra.mxu0 %v691
  %882 = vmatprep.subr.bf16.mxu0 %v688
  %883 = vmatpush2.bf16.msra.mxu0 %v687
  %884 = vmatprep.subr.bf16.mxu0 %v684
  %885 = vmatpush2.bf16.msra.mxu0 %v683
  %886 = vmatprep.subr.bf16.mxu0 %v680
  %887 = vmatpush2.bf16.msra.mxu0 %v679
  %888 = vmatprep.subr.bf16.mxu0 %v676
  %889 = vmatpush2.bf16.msra.mxu0 %v675
  %890 = vmatprep.subr.bf16.mxu0 %v672
  %891 = vmatpush2.bf16.msra.mxu0 %v671
  %892 = vmatprep.subr.bf16.mxu0 %v668
  %893 = vmatpush2.bf16.msra.mxu0 %v667
  %894 = vmatprep.subr.bf16.mxu0 %v664
  %895 = vmatpush2.bf16.msra.mxu0 %v663
  %896 = vmatprep.mubr.bf16.mxu0 %v178
  %897 = vmatmul.mubr.bf16.gmra.mxu0 %v177
  %v898 = vpop.f32.mrf.mxu0
  %v899 = vadd.f32 %v858, %v898
  %v900 = vpop.f32.mrf.mxu0
  %v901 = vadd.f32 %v860, %v900
  %v902 = vpop.f32.mrf.mxu0
  %v903 = vpop.f32.mrf.mxu0
  %904 = vdwg.mxu0
  %905 = vmatprep.subr.bf16.mxu0 %v598
  %906 = vmatpush1.bf16.msra.mxu0 %v597
  %907 = vmatprep.subr.bf16.mxu0 %v594
  %908 = vmatpush1.bf16.msra.mxu0 %v593
  %909 = vmatprep.subr.bf16.mxu0 %v590
  %910 = vmatpush1.bf16.msra.mxu0 %v589
  %911 = vmatprep.subr.bf16.mxu0 %v586
  %912 = vmatpush1.bf16.msra.mxu0 %v585
  %913 = vmatprep.subr.bf16.mxu0 %v582
  %914 = vmatpush1.bf16.msra.mxu0 %v581
  %915 = vmatprep.subr.bf16.mxu0 %v578
  %916 = vmatpush1.bf16.msra.mxu0 %v577
  %917 = vmatprep.subr.bf16.mxu0 %v574
  %918 = vmatpush1.bf16.msra.mxu0 %v573
  %919 = vmatprep.subr.bf16.mxu0 %v570
  %920 = vmatpush1.bf16.msra.mxu0 %v569
  %921 = vmatprep.subr.bf16.mxu0 %v630
  %922 = vmatpush2.bf16.msra.mxu0 %v629
  %923 = vmatprep.subr.bf16.mxu0 %v626
  %924 = vmatpush2.bf16.msra.mxu0 %v625
  %925 = vmatprep.subr.bf16.mxu0 %v622
  %926 = vmatpush2.bf16.msra.mxu0 %v621
  %927 = vmatprep.subr.bf16.mxu0 %v618
  %928 = vmatpush2.bf16.msra.mxu0 %v617
  %929 = vmatprep.subr.bf16.mxu0 %v614
  %930 = vmatpush2.bf16.msra.mxu0 %v613
  %931 = vmatprep.subr.bf16.mxu0 %v610
  %932 = vmatpush2.bf16.msra.mxu0 %v609
  %933 = vmatprep.subr.bf16.mxu0 %v606
  %934 = vmatpush2.bf16.msra.mxu0 %v605
  %935 = vmatprep.subr.bf16.mxu0 %v602
  %936 = vmatpush2.bf16.msra.mxu0 %v601
  %937 = vmatprep.mubr.bf16.mxu0 %v176
  %938 = vmatmul.mubr.bf16.gmra.mxu0 %v175
  %v939 = vpop.f32.mrf.mxu0
  %v940 = vadd.f32 %v160, %v939
  %v941 = vpop.f32.mrf.mxu0
  %v942 = vadd.f32 %v164, %v941
  %v943 = vpop.f32.mrf.mxu0
  %v944 = vpop.f32.mrf.mxu0
  %945 = vdwg.mxu0
  %946 = vmatprep.subr.bf16.mxu0 %v662
  %947 = vmatpush1.bf16.msra.mxu0 %v661
  %948 = vmatprep.subr.bf16.mxu0 %v658
  %949 = vmatpush1.bf16.msra.mxu0 %v657
  %950 = vmatprep.subr.bf16.mxu0 %v654
  %951 = vmatpush1.bf16.msra.mxu0 %v653
  %952 = vmatprep.subr.bf16.mxu0 %v650
  %953 = vmatpush1.bf16.msra.mxu0 %v649
  %954 = vmatprep.subr.bf16.mxu0 %v646
  %955 = vmatpush1.bf16.msra.mxu0 %v645
  %956 = vmatprep.subr.bf16.mxu0 %v642
  %957 = vmatpush1.bf16.msra.mxu0 %v641
  %958 = vmatprep.subr.bf16.mxu0 %v638
  %959 = vmatpush1.bf16.msra.mxu0 %v637
  %960 = vmatprep.subr.bf16.mxu0 %v634
  %961 = vmatpush1.bf16.msra.mxu0 %v633
  %962 = vmatprep.subr.bf16.mxu0 %v694
  %963 = vmatpush2.bf16.msra.mxu0 %v693
  %964 = vmatprep.subr.bf16.mxu0 %v690
  %965 = vmatpush2.bf16.msra.mxu0 %v689
  %966 = vmatprep.subr.bf16.mxu0 %v686
  %967 = vmatpush2.bf16.msra.mxu0 %v685
  %968 = vmatprep.subr.bf16.mxu0 %v682
  %969 = vmatpush2.bf16.msra.mxu0 %v681
  %970 = vmatprep.subr.bf16.mxu0 %v678
  %971 = vmatpush2.bf16.msra.mxu0 %v677
  %972 = vmatprep.subr.bf16.mxu0 %v674
  %973 = vmatpush2.bf16.msra.mxu0 %v673
  %974 = vmatprep.subr.bf16.mxu0 %v670
  %975 = vmatpush2.bf16.msra.mxu0 %v669
  %976 = vmatprep.subr.bf16.mxu0 %v666
  %977 = vmatpush2.bf16.msra.mxu0 %v665
  %978 = vmatprep.mubr.bf16.mxu0 %v178
  %979 = vmatmul.mubr.bf16.gmra.mxu0 %v177
  %v980 = vpop.f32.mrf.mxu0
  %v981 = vadd.f32 %v940, %v980
  %v982 = vpop.f32.mrf.mxu0
  %v983 = vadd.f32 %v942, %v982
  %v984 = vpop.f32.mrf.mxu0
  %v985 = vpop.f32.mrf.mxu0
  %986 = vdwg.mxu0
  %v987 = vld [vmem:[%s3] sm:$0xff]
  %v988 = vld [vmem:[%s3 + $0x8] sm:$0xff]
  %v989 = vld [vmem:[%s3 + $0x10] sm:$0xff]
  %v990 = vld [vmem:[%s3 + $0x18] sm:$0xff]
  %v991 = vadd.f32 %v899, %v987
  %v992 = vadd.f32 %v901, %v988
  %v993 = vadd.f32 %v981, %v989
  %v994 = vadd.f32 %v983, %v990
  %995 = vst [vmem:[%s4] sm:$0xff] %v991
  %996 = vst [vmem:[%s4 + $0x8] sm:$0xff] %v992
  %997 = vst [vmem:[%s4 + $0x10] sm:$0xff] %v993
  %998 = vst [vmem:[%s4 + $0x18] sm:$0xff] %v994
  // Predicated region
  $region18: #{resnet_forward.3} parent=0 // pred_check
    _
  $region19: #{resnet_forward.3} parent=0 // pred_check_branch
    %1000 = sbr.rel (0) target = $region21
  $region20: #{resnet_forward.3} parent=0 // pred_region
    _
  $region21: #{resnet_forward.3} parent=0 // pred_fallthru
    _
  // Predicated region
  $region22: #{resnet_forward.3} parent=0 // pred_check
    _
  $region23: #{resnet_forward.3} parent=0 // pred_check_branch
    %1002 = sbr.rel (0) target = $region25
  $region24: #{resnet_forward.3} parent=0 // pred_region
    _
  $region25: #{resnet_forward.3} parent=0 // pred_fallthru
    _

</llo_original>
